<compile_context>
chip_gen: v6e
topology: v6e:2x2x1
jax: 0.10.0
libtpu: 0.0.40
codegen_flags: <defaults>
</compile_context>

<pallas_src>
import functools
import math

import jax
import jax.numpy as jnp
from jax import lax
from jax.experimental import pallas as pl
from jax.experimental.pallas import tpu as pltpu


_MASK_VALUE = -1e30   # finite large-negative instead of -inf (NaN-safe)


# ----------------------------------------------------------------------------
# VMEM budgeting / tile selection helpers
# ----------------------------------------------------------------------------
def _vmem_budget_bytes():
    cap = 64 * 1024 * 1024                       # conservative default (v7x)
    try:
        info = pltpu.get_tpu_info()
        cap = int(getattr(info, "vmem_capacity_bytes", cap))
    except Exception:
        pass
    # 96 MiB on 128 MiB parts (v5e/v6e), 48 MiB on 64 MiB parts (v7x).
    return min(3 * cap // 4, cap - 16 * 1024 * 1024)


def _pick_block(dim, prefs):
    for p in prefs:
        if p <= dim and dim % p == 0:
            return p
    return dim


def _attention_tiles(B, H, S, T, D, q_isz, kv_isz, out_isz,
                     block_q, block_kv, budget):
    bq = S if S <= block_q else block_q
    bkv = T if T <= block_kv else block_kv
    # head-group candidates: all heads, or any divisor with lane-aligned g*D.
    hg_cands = [H] + [g for g in range(H - 1, 0, -1)
                      if H % g == 0 and (g * D) % 128 == 0]
    hg_idx = 0

    def footprint(hg, bq_, bkv_):
        dbl = 2 * (hg * bq_ * D * q_isz                # q block (double-buffered)
                   + 2 * hg * bkv_ * D * kv_isz        # k + v blocks
                   + bq_ * hg * D * out_isz)           # output block
        # scratch: m/l padded to 128 lanes, f32 acc, scaled-q copy
        scr = 2 * hg * bq_ * 128 * 4 + hg * bq_ * D * 4 + hg * bq_ * D * kv_isz
        return int(1.15 * (dbl + scr))

    while footprint(hg_cands[hg_idx], bq, bkv) > budget:
        if bkv > 256 and bkv % 16 == 0:
            bkv //= 2
        elif bq > 256 and bq % 16 == 0:
            bq //= 2
        elif hg_idx + 1 < len(hg_cands):
            hg_idx += 1
        else:
            break
    hg = hg_cands[hg_idx]

    # v7x megacore occupancy: make sure the parallel grid extent is >= 2.
    if B * pl.cdiv(S, bq) * (H // hg) < 2 and hg_idx + 1 < len(hg_cands):
        hg = hg_cands[hg_idx + 1]
    return hg, bq, bkv


# ----------------------------------------------------------------------------
# Kernel 1: flash-style attention over head groups, lane-dense [bq, hg*D] out.
# ----------------------------------------------------------------------------
def _attn_kernel(q_ref, k_ref, v_ref, o_ref, m_scr, l_scr, acc_scr, qs_scr, *,
                 cache_len, memory_length, kv_len, head_dim, temperature,
                 block_q, block_kv, heads):
    # q_ref: [1, hg, bq, D]   k_ref/v_ref: [1, hg, bkv, D]   o_ref: [1, bq, hg*D]
    # scratch: m/l [hg, bq, 1] f32, acc [hg, bq, D] f32, qs [hg, bq, D] (scaled q)
    si = pl.program_id(2)
    ti = pl.program_id(3)
    nt = pl.num_programs(3)

    @pl.when(ti == 0)
    def _init():
        # -1e30 (not -inf) is safe: block ti=0 always contains column 0, which
        # is unmasked for every row (col 0 < C + row + 1), and ti=0 is never
        # skipped by the fully-masked gate below, so l > 0 for every row.
        m_scr[...] = jnp.full(m_scr.shape, _MASK_VALUE, dtype=m_scr.dtype)
        l_scr[...] = jnp.zeros_like(l_scr)
        acc_scr[...] = jnp.zeros_like(acc_scr)
        # Scale q once per q tile (it is resident across the KV axis).
        scale = 1.0 / (math.sqrt(head_dim) * temperature)
        qs_scr[...] = (q_ref[0] * scale).astype(qs_scr.dtype)

    # Block-level skip: the whole KV block is masked for every row of this q
    # block (causal tail) or lies entirely in the T padding.
    col0 = ti * block_kv
    row_hi = (si + 1) * block_q
    cutoff = cache_len + memory_length
    fully_masked = (col0 >= cache_len + jnp.maximum(memory_length, row_hi)) | \
                   (col0 >= kv_len)

    @pl.when(jnp.logical_not(fully_masked))
    def _update():
        q = qs_scr[...]                                   # [hg, bq, D] pre-scaled
        k = k_ref[0]                                      # [hg, bkv, D]
        v = v_ref[0]                                      # [hg, bkv, D]

        s = jnp.einsum("hqd,hkd->hqk", q, k,
                       preferred_element_type=jnp.float32)   # [hg, bq, bkv]

        # Mask (identical across heads): masked iff col >= C+M and col >= C+row+1
        # (plus padded columns col >= kv_len).
        row = si * block_q + lax.broadcasted_iota(
            jnp.int32, (block_q, block_kv), 0)
        col = col0 + lax.broadcasted_iota(
            jnp.int32, (block_q, block_kv), 1)
        masked = ((col >= cutoff) & (col >= cache_len + row + 1)) | (col >= kv_len)
        s = jnp.where(masked[None, :, :], _MASK_VALUE, s)

        # Online softmax update.
        m_prev = m_scr[...]                                           # [hg, bq, 1]
        m_new = jnp.maximum(m_prev, jnp.max(s, axis=-1, keepdims=True))
        alpha = jnp.exp(m_prev - m_new)
        p = jnp.exp(s - m_new)                                        # [hg, bq, bkv]
        l_scr[...] = alpha * l_scr[...] + jnp.sum(p, axis=-1, keepdims=True)
        acc_scr[...] = alpha * acc_scr[...] + jnp.einsum(
            "hqk,hkd->hqd", p.astype(v.dtype), v,
            preferred_element_type=jnp.float32)
        m_scr[...] = m_new

    @pl.when(ti == nt - 1)
    def _finalize():
        # Deferred normalisation of the small accumulator, then merge heads
        # along lanes so the output is a lane-dense [bq, hg*D] store.
        inv_l = pl.reciprocal(l_scr[...], approx=False)
        out = acc_scr[...] * inv_l                                    # [hg, bq, D]
        if heads == 1:
            merged = out[0]
        else:
            merged = jnp.concatenate([out[h] for h in range(heads)], axis=-1)
        o_ref[0] = merged.astype(o_ref.dtype)


# ----------------------------------------------------------------------------
# Kernel 2: output projection — plain tiled matmul, one wide-K dot per step.
# ----------------------------------------------------------------------------
def _proj_kernel(x_ref, w_ref, b_ref, o_ref, acc_ref):
    # x_ref: [1, bs, bk]  w_ref: [bk, bn]  b_ref: [1, bn]
    # o_ref: [1, bs, bn]  acc_ref: [bs, bn] f32
    kb = pl.program_id(3)

    @pl.when(kb == 0)
    def _init():
        acc_ref[...] = jnp.zeros_like(acc_ref)

    acc_ref[...] += jnp.dot(x_ref[0], w_ref[...],
                            preferred_element_type=jnp.float32)

    @pl.when(kb == pl.num_programs(3) - 1)
    def _finalize():
        o_ref[0] = (acc_ref[...] + b_ref[...]).astype(o_ref.dtype)


# ----------------------------------------------------------------------------
# Wrapper
# ----------------------------------------------------------------------------
def multi_head_attention(q, k, v, memory_length, weight, bias, *,
                         temperature=1.0, matmul_dtype=None,
                         block_q=512, block_kv=512,
                         block_s_proj=512, block_n=512, block_k_proj=1024):
    B, H, S, D = q.shape
    T = k.shape[2]
    C = T - S
    HID = H * D
    memory_length = int(memory_length)

    budget = _vmem_budget_bytes()

    # Cast K/V only if they are re-streamed >= 2 times (S spans >1 q block);
    # otherwise the wrapper cast would cost an extra read+write for nothing.
    cast_kv = (matmul_dtype is not None) and (S > block_q)
    k_in = k.astype(matmul_dtype) if cast_kv else k
    v_in = v.astype(matmul_dtype) if cast_kv else v
    attn_dtype = matmul_dtype if matmul_dtype is not None else q.dtype

    q_isz = jnp.dtype(q.dtype).itemsize
    kv_isz = jnp.dtype(k_in.dtype).itemsize
    attn_isz = jnp.dtype(attn_dtype).itemsize

    hg, bq, bkv = _attention_tiles(B, H, S, T, D, q_isz, kv_isz, attn_isz,
                                   block_q, block_kv, budget)

    # Pad ragged S / T up to tile multiples; padded columns are masked in-kernel,
    # padded rows are sliced off at the end.
    S_pad = pl.cdiv(S, bq) * bq
    T_pad = pl.cdiv(T, bkv) * bkv
    q_in = q if S_pad == S else jnp.pad(q, ((0, 0), (0, 0), (0, S_pad - S), (0, 0)))
    if T_pad != T:
        k_in = jnp.pad(k_in, ((0, 0), (0, 0), (0, T_pad - T), (0, 0)))
        v_in = jnp.pad(v_in, ((0, 0), (0, 0), (0, T_pad - T), (0, 0)))

    restream = S_pad // bq
    attn = pl.pallas_call(
        functools.partial(_attn_kernel,
                          cache_len=C, memory_length=memory_length, kv_len=T,
                          head_dim=D, temperature=float(temperature),
                          block_q=bq, block_kv=bkv, heads=hg),
        out_shape=jax.ShapeDtypeStruct((B, S_pad, HID), attn_dtype),
        grid=(B, H // hg, S_pad // bq, T_pad // bkv),
        in_specs=[pl.BlockSpec((1, hg, bq, D), lambda b, g, si, ti: (b, g, si, 0)),
                  pl.BlockSpec((1, hg, bkv, D), lambda b, g, si, ti: (b, g, ti, 0)),
                  pl.BlockSpec((1, hg, bkv, D), lambda b, g, si, ti: (b, g, ti, 0))],
        out_specs=pl.BlockSpec((1, bq, hg * D), lambda b, g, si, ti: (b, si, g)),
        scratch_shapes=[pltpu.VMEM((hg, bq, 1), jnp.float32),
                        pltpu.VMEM((hg, bq, 1), jnp.float32),
                        pltpu.VMEM((hg, bq, D), jnp.float32),
                        pltpu.VMEM((hg, bq, D), k_in.dtype)],
        compiler_params=pltpu.CompilerParams(
            dimension_semantics=("parallel", "parallel", "parallel", "arbitrary"),
            vmem_limit_bytes=budget),
        cost_estimate=pl.CostEstimate(
            flops=int(4 * B * H * S_pad * T_pad * D),
            transcendentals=int(B * H * S_pad * T_pad),
            bytes_accessed=int(B * H * S_pad * D * q_isz
                               + restream * 2 * B * H * T_pad * D * kv_isz
                               + B * S_pad * HID * attn_isz)),
    )(q_in, k_in, v_in)

    # Mask: plain XLA iota/select (the [B,H,S,T] f32 form is only kept to match
    # the module's return signature; prefer the [S,T] slice in real callers).
    row = jnp.arange(S, dtype=jnp.int32)[:, None]
    col = jnp.arange(T, dtype=jnp.int32)[None, :]
    mask2d = ((col >= C + memory_length) & (col >= C + row + 1)).astype(jnp.float32)
    mask = jnp.broadcast_to(mask2d[None, None], (B, H, S, T))

    # Output projection: x[B,S,HID] @ weight.T[HID,HID] + bias.
    w_t = jnp.transpose(weight)                 # [HID_in, HID_out]
    if matmul_dtype is not None:
        w_t = w_t.astype(matmul_dtype)
    # TODO(synk): optional fp8 weight cast on v7x if accuracy allows.
    bias2 = bias.reshape(1, HID).astype(jnp.float32)

    bs = _pick_block(S_pad, (block_s_proj, 256, 128, bq))
    bn = _pick_block(HID, (block_n, 256, 128))
    bk = _pick_block(HID, (block_k_proj, 512, 256))
    w_isz = jnp.dtype(w_t.dtype).itemsize

    # TODO(synk): for HID small enough to keep the whole weight in VMEM, this
    # projection could be fused into the attention finalize to skip the
    # intermediate HBM round trip entirely.
    out = pl.pallas_call(
        _proj_kernel,
        out_shape=jax.ShapeDtypeStruct((B, S_pad, HID), q.dtype),
        grid=(B, S_pad // bs, HID // bn, HID // bk),
        in_specs=[pl.BlockSpec((1, bs, bk), lambda b, si, j, kb: (b, si, kb)),
                  pl.BlockSpec((bk, bn), lambda b, si, j, kb: (kb, j)),
                  pl.BlockSpec((1, bn), lambda b, si, j, kb: (0, j))],
        out_specs=pl.BlockSpec((1, bs, bn), lambda b, si, j, kb: (b, si, j)),
        scratch_shapes=[pltpu.VMEM((bs, bn), jnp.float32)],
        compiler_params=pltpu.CompilerParams(
            dimension_semantics=("parallel", "parallel", "parallel", "arbitrary"),
            vmem_limit_bytes=budget),
        cost_estimate=pl.CostEstimate(
            flops=int(2 * B * S_pad * HID * HID),
            transcendentals=0,
            bytes_accessed=int(B * S_pad * HID * (attn_isz + q_isz)
                               + (B * S_pad // bs) * HID * HID * w_isz
                               + HID * 4)),
    )(attn, w_t, bias2)

    if S_pad != S:
        out = out[:, :S, :]
    return out, mask


# ----------------------------------------------------------------------------
# Pure-JAX reference (mirrors the PyTorch module)
# ----------------------------------------------------------------------------
def _reference(q, k, v, memory_length, weight, bias, temperature):
    B, H, S, D = q.shape
    T = k.shape[2]
    C = T - S
    HID = H * D
    scores = jnp.einsum("bhsd,bhtd->bhst", q, k) / math.sqrt(D) / temperature
    row = jnp.arange(S)[:, None]
    col = jnp.arange(T)[None, :]
    mask = (col >= C + memory_length) & (col >= C + row + 1)
    mask = jnp.broadcast_to(mask, (B, H, S, T)).astype(jnp.float32)
    scores = jnp.where(mask == 1.0, -jnp.inf, scores)
    p = jax.nn.softmax(scores, axis=-1)
    attn = jnp.einsum("bhst,bhtd->bhsd", p, v)
    attn = jnp.transpose(attn, (0, 2, 1, 3)).reshape(B, S, HID)
    out = attn @ weight.T + bias
    return out, mask


if __name__ == "__main__":
    B, H, S, D = 2, 4, 8, 8          # hidden_dim = 32
    CACHE_LEN = 8
    T = CACHE_LEN + S
    HID = H * D
    memory_length = 3
    temperature = 1.0

    key = jax.random.PRNGKey(0)
    kq, kk, kv, kw, kb = jax.random.split(key, 5)
    q = jax.random.normal(kq, (B, H, S, D), dtype=jnp.float32)
    k = jax.random.normal(kk, (B, H, T, D), dtype=jnp.float32)
    v = jax.random.normal(kv, (B, H, T, D), dtype=jnp.float32)

    # PyTorch-style Linear(hidden_dim, hidden_dim) init bounds.
    bound = 1.0 / math.sqrt(HID)
    weight = jax.random.uniform(kw, (HID, HID), jnp.float32, -bound, bound)
    bias = jax.random.uniform(kb, (HID,), jnp.float32, -bound, bound)

    out, mask = multi_head_attention(q, k, v, memory_length, weight, bias,
                                     temperature=temperature)
    out = jax.block_until_ready(out)
    mask = jax.block_until_ready(mask)

    ref_out, ref_mask = _reference(q, k, v, memory_length, weight, bias,
                                   temperature)
    assert out.shape == (B, S, HID) and mask.shape == (B, H, S, T)
    assert jnp.array_equal(mask, ref_mask)
    assert jnp.allclose(out, ref_out, atol=1e-3, rtol=1e-3), \
        float(jnp.max(jnp.abs(out - ref_out)))

    # Optional low-precision MXU path (recommended default on v5e); softmax
    # statistics stay f32.
    out_bf16, _ = multi_head_attention(q, k, v, memory_length, weight, bias,
                                       temperature=temperature,
                                       matmul_dtype=jnp.bfloat16)
    out_bf16 = jax.block_until_ready(out_bf16)
    assert jnp.allclose(out_bf16, ref_out, atol=5e-2, rtol=5e-2)

    print("KERNEL_OK")
</pallas_src>

<mosaic_0001>
module attributes {stable_mosaic.version = 11 : i64} {
  func.func @_attn_kernel(%arg0: i32, %arg1: i32, %arg2: i32, %arg3: i32, %arg4: memref<1x4x8x8xf32, #tpu.memory_space<vmem>>, %arg5: memref<1x4x16x8xf32, #tpu.memory_space<vmem>>, %arg6: memref<1x4x16x8xf32, #tpu.memory_space<vmem>>, %arg7: memref<1x8x32xf32, #tpu.memory_space<vmem>>, %arg8: memref<4x8x1xf32, #tpu.memory_space<vmem>>, %arg9: memref<4x8x1xf32, #tpu.memory_space<vmem>>, %arg10: memref<4x8x8xf32, #tpu.memory_space<vmem>>, %arg11: memref<4x8x8xf32, #tpu.memory_space<vmem>>) attributes {dimension_semantics = [#tpu.dimension_semantics<parallel>, #tpu.dimension_semantics<parallel>, #tpu.dimension_semantics<parallel>, #tpu.dimension_semantics<arbitrary>], iteration_bounds = array<i64: 2, 1, 1, 1>, scalar_prefetch = 0 : i64, scratch_operands = 4 : i64, tpu.core_type = #tpu.core_type<tc>, window_params = [{transform_indices = @transform_0, window_bounds = array<i64: 1, 4, 8, 8>}, {transform_indices = @transform_1, window_bounds = array<i64: 1, 4, 16, 8>}, {transform_indices = @transform_2, window_bounds = array<i64: 1, 4, 16, 8>}, {transform_indices = @transform_3, window_bounds = array<i64: 1, 8, 32>}]} {
    %c0_i32 = arith.constant 0 : i32
    %0 = arith.cmpi eq, %arg3, %c0_i32 : i32
    %1 = arith.extui %0 : i1 to i32
    %c0_i32_0 = arith.constant 0 : i32
    %2 = arith.cmpi ne, %1, %c0_i32_0 : i32
    scf.if %2 {
      %cst = arith.constant -1.000000e+30 : f32
      %17 = vector.broadcast %cst : f32 to vector<4x8x1xf32>
      %c0 = arith.constant 0 : index
      %c0_6 = arith.constant 0 : index
      %c0_7 = arith.constant 0 : index
      %18 = vector.load %arg8[%c0, %c0_6, %c0_7] : memref<4x8x1xf32, #tpu.memory_space<vmem>>, vector<4x8x1xf32>
      tpu.vector_store %arg8[%c0, %c0_6, %c0_7], %17 {strides = array<i32>} : memref<4x8x1xf32, #tpu.memory_space<vmem>>, vector<4x8x1xf32>,
      %cst_8 = arith.constant 0.000000e+00 : f32
      %19 = vector.broadcast %cst_8 : f32 to vector<4x8x1xf32>
      %c0_9 = arith.constant 0 : index
      %c0_10 = arith.constant 0 : index
      %c0_11 = arith.constant 0 : index
      %20 = vector.load %arg9[%c0_9, %c0_10, %c0_11] : memref<4x8x1xf32, #tpu.memory_space<vmem>>, vector<4x8x1xf32>
      tpu.vector_store %arg9[%c0_9, %c0_10, %c0_11], %19 {strides = array<i32>} : memref<4x8x1xf32, #tpu.memory_space<vmem>>, vector<4x8x1xf32>,
      %cst_12 = arith.constant 0.000000e+00 : f32
      %21 = vector.broadcast %cst_12 : f32 to vector<4x8x8xf32>
      %c0_13 = arith.constant 0 : index
      %c0_14 = arith.constant 0 : index
      %c0_15 = arith.constant 0 : index
      %22 = vector.load %arg10[%c0_13, %c0_14, %c0_15] : memref<4x8x8xf32, #tpu.memory_space<vmem>>, vector<4x8x8xf32>
      tpu.vector_store %arg10[%c0_13, %c0_14, %c0_15], %21 {strides = array<i32>} : memref<4x8x8xf32, #tpu.memory_space<vmem>>, vector<4x8x8xf32>,
      %c0_16 = arith.constant 0 : index
      %c0_17 = arith.constant 0 : index
      %c0_18 = arith.constant 0 : index
      %c0_19 = arith.constant 0 : index
      %23 = vector.load %arg4[%c0_16, %c0_17, %c0_18, %c0_19] : memref<1x4x8x8xf32, #tpu.memory_space<vmem>>, vector<1x4x8x8xf32>
      %24 = vector.shape_cast %23 : vector<1x4x8x8xf32> to vector<4x8x8xf32>
      %cst_20 = arith.constant 0.353553385 : f32
      %25 = vector.broadcast %cst_20 : f32 to vector<4x8x8xf32>
      %26 = arith.mulf %24, %25 : vector<4x8x8xf32>
      %c0_21 = arith.constant 0 : index
      %c0_22 = arith.constant 0 : index
      %c0_23 = arith.constant 0 : index
      %27 = vector.load %arg11[%c0_21, %c0_22, %c0_23] : memref<4x8x8xf32, #tpu.memory_space<vmem>>, vector<4x8x8xf32>
      tpu.vector_store %arg11[%c0_21, %c0_22, %c0_23], %26 {strides = array<i32>} : memref<4x8x8xf32, #tpu.memory_space<vmem>>, vector<4x8x8xf32>,
    } else {
    }
    %c16_i32 = arith.constant 16 : i32
    %3 = arith.muli %arg3, %c16_i32 : i32
    %c1_i32 = arith.constant 1 : i32
    %4 = arith.addi %arg2, %c1_i32 : i32
    %c8_i32 = arith.constant 8 : i32
    %5 = arith.muli %4, %c8_i32 : i32
    %c3_i32 = arith.constant 3 : i32
    %6 = arith.maxsi %c3_i32, %5 : i32
    %c8_i32_1 = arith.constant 8 : i32
    %7 = arith.addi %c8_i32_1, %6 : i32
    %8 = arith.cmpi sge, %3, %7 : i32
    %c16_i32_2 = arith.constant 16 : i32
    %9 = arith.cmpi sge, %3, %c16_i32_2 : i32
    %10 = arith.ori %8, %9 : i1
    %true = arith.constant true
    %11 = arith.xori %10, %true : i1
    %12 = arith.extui %11 : i1 to i32
    %c0_i32_3 = arith.constant 0 : i32
    %13 = arith.cmpi ne, %12, %c0_i32_3 : i32
    scf.if %13 {
      %c0 = arith.constant 0 : index
      %c0_6 = arith.constant 0 : index
      %c0_7 = arith.constant 0 : index
      %17 = vector.load %arg11[%c0, %c0_6, %c0_7] : memref<4x8x8xf32, #tpu.memory_space<vmem>>, vector<4x8x8xf32>
      %c0_8 = arith.constant 0 : index
      %c0_9 = arith.constant 0 : index
      %c0_10 = arith.constant 0 : index
      %c0_11 = arith.constant 0 : index
      %18 = vector.load %arg5[%c0_8, %c0_9, %c0_10, %c0_11] : memref<1x4x16x8xf32, #tpu.memory_space<vmem>>, vector<1x4x16x8xf32>
      %19 = vector.shape_cast %18 : vector<1x4x16x8xf32> to vector<4x16x8xf32>
      %c0_12 = arith.constant 0 : index
      %c0_13 = arith.constant 0 : index
      %c0_14 = arith.constant 0 : index
      %c0_15 = arith.constant 0 : index
      %20 = vector.load %arg6[%c0_12, %c0_13, %c0_14, %c0_15] : memref<1x4x16x8xf32, #tpu.memory_space<vmem>>, vector<1x4x16x8xf32>
      %21 = vector.shape_cast %20 : vector<1x4x16x8xf32> to vector<4x16x8xf32>
      "tpu.trace_start"() <{level = 10 : i32, message = "hqd,hkd->hqk"}> : () -> ()
      %cst = arith.constant dense<0.000000e+00> : vector<4x8x16xf32>
      %22 = tpu.matmul %17, %19, %cst {dimension_numbers = #tpu.dot_dimension_numbers<[2], [2], [1], [1], [0, 0, 0, 1, 1, 1], [0], [0]>} : vector<4x8x8xf32>, vector<4x16x8xf32>, vector<4x8x16xf32> -> vector<4x8x16xf32>
      "tpu.trace_stop"() : () -> ()
      %c8_i32_16 = arith.constant 8 : i32
      %23 = arith.muli %arg2, %c8_i32_16 : i32
      %24 = tpu.iota {dimensions = array<i32: 0>} : vector<8x16xi32>
      %25 = vector.broadcast %23 : i32 to vector<8x16xi32>
      %26 = arith.addi %25, %24 : vector<8x16xi32>
      %27 = tpu.iota {dimensions = array<i32: 1>} : vector<8x16xi32>
      %28 = vector.broadcast %3 : i32 to vector<8x16xi32>
      %29 = arith.addi %28, %27 : vector<8x16xi32>
      %c11_i32 = arith.constant 11 : i32
      %30 = vector.broadcast %c11_i32 : i32 to vector<8x16xi32>
      %31 = arith.cmpi sge, %29, %30 : vector<8x16xi32>
      %c8_i32_17 = arith.constant 8 : i32
      %32 = vector.broadcast %c8_i32_17 : i32 to vector<8x16xi32>
      %33 = arith.addi %32, %26 : vector<8x16xi32>
      %c1_i32_18 = arith.constant 1 : i32
      %34 = vector.broadcast %c1_i32_18 : i32 to vector<8x16xi32>
      %35 = arith.addi %33, %34 : vector<8x16xi32>
      %36 = arith.cmpi sge, %29, %35 : vector<8x16xi32>
      %37 = arith.andi %31, %36 : vector<8x16xi1>
      %c16_i32_19 = arith.constant 16 : i32
      %38 = vector.broadcast %c16_i32_19 : i32 to vector<8x16xi32>
      %39 = arith.cmpi sge, %29, %38 : vector<8x16xi32>
      %40 = arith.ori %37, %39 : vector<8x16xi1>
      %41 = vector.shape_cast %40 : vector<8x16xi1> to vector<1x8x16xi1>
      %cst_20 = arith.constant -1.000000e+30 : f32
      %42 = vector.shape_cast %41 : vector<1x8x16xi1> to vector<1x8x16xi1>
      %43 = vector.broadcast %42 : vector<1x8x16xi1> to vector<4x8x16xi1>
      %44 = vector.broadcast %cst_20 : f32 to vector<4x8x16xf32>
      %45 = arith.select %43, %44, %22 : vector<4x8x16xi1>, vector<4x8x16xf32>
      %c0_21 = arith.constant 0 : index
      %c0_22 = arith.constant 0 : index
      %c0_23 = arith.constant 0 : index
      %46 = vector.load %arg8[%c0_21, %c0_22, %c0_23] : memref<4x8x1xf32, #tpu.memory_space<vmem>>, vector<4x8x1xf32>
      %cst_24 = arith.constant dense<0xFF800000> : vector<4x8xf32>
      %47 = vector.multi_reduction <maximumf>, %45, %cst_24 [2] : vector<4x8x16xf32> to vector<4x8xf32>
      %48 = vector.shape_cast %47 : vector<4x8xf32> to vector<4x8x1xf32>
      %49 = arith.maximumf %46, %48 : vector<4x8x1xf32>
      %50 = arith.subf %46, %49 : vector<4x8x1xf32>
      %51 = math.exp %50 : vector<4x8x1xf32>
      %52 = vector.broadcast %49 : vector<4x8x1xf32> to vector<4x8x16xf32>
      %53 = arith.subf %45, %52 : vector<4x8x16xf32>
      %54 = math.exp %53 : vector<4x8x16xf32>
      %c0_25 = arith.constant 0 : index
      %c0_26 = arith.constant 0 : index
      %c0_27 = arith.constant 0 : index
      %55 = vector.load %arg9[%c0_25, %c0_26, %c0_27] : memref<4x8x1xf32, #tpu.memory_space<vmem>>, vector<4x8x1xf32>
      %56 = arith.mulf %51, %55 : vector<4x8x1xf32>
      %cst_28 = arith.constant dense<0.000000e+00> : vector<4x8xf32>
      %57 = vector.multi_reduction <add>, %54, %cst_28 [2] : vector<4x8x16xf32> to vector<4x8xf32>
      %58 = vector.shape_cast %57 : vector<4x8xf32> to vector<4x8x1xf32>
      %59 = arith.addf %56, %58 : vector<4x8x1xf32>
      %c0_29 = arith.constant 0 : index
      %c0_30 = arith.constant 0 : index
      %c0_31 = arith.constant 0 : index
      %60 = vector.load %arg9[%c0_29, %c0_30, %c0_31] : memref<4x8x1xf32, #tpu.memory_space<vmem>>, vector<4x8x1xf32>
      tpu.vector_store %arg9[%c0_29, %c0_30, %c0_31], %59 {strides = array<i32>} : memref<4x8x1xf32, #tpu.memory_space<vmem>>, vector<4x8x1xf32>,
      %c0_32 = arith.constant 0 : index
      %c0_33 = arith.constant 0 : index
      %c0_34 = arith.constant 0 : index
      %61 = vector.load %arg10[%c0_32, %c0_33, %c0_34] : memref<4x8x8xf32, #tpu.memory_space<vmem>>, vector<4x8x8xf32>
      %62 = vector.broadcast %51 : vector<4x8x1xf32> to vector<4x8x8xf32>
      %63 = arith.mulf %62, %61 : vector<4x8x8xf32>
      "tpu.trace_start"() <{level = 10 : i32, message = "hqk,hkd->hqd"}> : () -> ()
      %cst_35 = arith.constant dense<0.000000e+00> : vector<4x8x8xf32>
      %64 = tpu.matmul %54, %21, %cst_35 {dimension_numbers = #tpu.dot_dimension_numbers<[2], [1], [1], [2], [0, 0, 0, 1, 1, 2], [0], [0]>} : vector<4x8x16xf32>, vector<4x16x8xf32>, vector<4x8x8xf32> -> vector<4x8x8xf32>
      "tpu.trace_stop"() : () -> ()
      %65 = arith.addf %63, %64 : vector<4x8x8xf32>
      %c0_36 = arith.constant 0 : index
      %c0_37 = arith.constant 0 : index
      %c0_38 = arith.constant 0 : index
      %66 = vector.load %arg10[%c0_36, %c0_37, %c0_38] : memref<4x8x8xf32, #tpu.memory_space<vmem>>, vector<4x8x8xf32>
      tpu.vector_store %arg10[%c0_36, %c0_37, %c0_38], %65 {strides = array<i32>} : memref<4x8x8xf32, #tpu.memory_space<vmem>>, vector<4x8x8xf32>,
      %c0_39 = arith.constant 0 : index
      %c0_40 = arith.constant 0 : index
      %c0_41 = arith.constant 0 : index
      %67 = vector.load %arg8[%c0_39, %c0_40, %c0_41] : memref<4x8x1xf32, #tpu.memory_space<vmem>>, vector<4x8x1xf32>
      tpu.vector_store %arg8[%c0_39, %c0_40, %c0_41], %49 {strides = array<i32>} : memref<4x8x1xf32, #tpu.memory_space<vmem>>, vector<4x8x1xf32>,
    } else {
    }
    %c0_i32_4 = arith.constant 0 : i32
    %14 = arith.cmpi eq, %arg3, %c0_i32_4 : i32
    %15 = arith.extui %14 : i1 to i32
    %c0_i32_5 = arith.constant 0 : i32
    %16 = arith.cmpi ne, %15, %c0_i32_5 : i32
    scf.if %16 {
      %c0 = arith.constant 0 : index
      %c0_6 = arith.constant 0 : index
      %c0_7 = arith.constant 0 : index
      %17 = vector.load %arg9[%c0, %c0_6, %c0_7] : memref<4x8x1xf32, #tpu.memory_space<vmem>>, vector<4x8x1xf32>
      %18 = tpu.reciprocal %17 : vector<4x8x1xf32> -> vector<4x8x1xf32>
      %c0_8 = arith.constant 0 : index
      %c0_9 = arith.constant 0 : index
      %c0_10 = arith.constant 0 : index
      %19 = vector.load %arg10[%c0_8, %c0_9, %c0_10] : memref<4x8x8xf32, #tpu.memory_space<vmem>>, vector<4x8x8xf32>
      %20 = vector.broadcast %18 : vector<4x8x1xf32> to vector<4x8x8xf32>
      %21 = arith.mulf %19, %20 : vector<4x8x8xf32>
      %22 = vector.extract_strided_slice %21 {offsets = [0, 0, 0], sizes = [1, 8, 8], strides = [1, 1, 1]} : vector<4x8x8xf32> to vector<1x8x8xf32>
      %23 = vector.shape_cast %22 : vector<1x8x8xf32> to vector<8x8xf32>
      %24 = vector.extract_strided_slice %21 {offsets = [1, 0, 0], sizes = [1, 8, 8], strides = [1, 1, 1]} : vector<4x8x8xf32> to vector<1x8x8xf32>
      %25 = vector.shape_cast %24 : vector<1x8x8xf32> to vector<8x8xf32>
      %26 = vector.extract_strided_slice %21 {offsets = [2, 0, 0], sizes = [1, 8, 8], strides = [1, 1, 1]} : vector<4x8x8xf32> to vector<1x8x8xf32>
      %27 = vector.shape_cast %26 : vector<1x8x8xf32> to vector<8x8xf32>
      %28 = vector.extract_strided_slice %21 {offsets = [3, 0, 0], sizes = [1, 8, 8], strides = [1, 1, 1]} : vector<4x8x8xf32> to vector<1x8x8xf32>
      %29 = vector.shape_cast %28 : vector<1x8x8xf32> to vector<8x8xf32>
      %30 = tpu.concatenate %23, %25, %27, %29 in 1 : vector<8x8xf32>, vector<8x8xf32>, vector<8x8xf32>, vector<8x8xf32> -> vector<8x32xf32>
      %c0_11 = arith.constant 0 : index
      %c0_12 = arith.constant 0 : index
      %c0_13 = arith.constant 0 : index
      %31 = vector.load %arg7[%c0_11, %c0_12, %c0_13] : memref<1x8x32xf32, #tpu.memory_space<vmem>>, vector<1x8x32xf32>
      %32 = vector.shape_cast %31 : vector<1x8x32xf32> to vector<8x32xf32>
      %33 = vector.shape_cast %30 : vector<8x32xf32> to vector<1x8x32xf32>
      tpu.vector_store %arg7[%c0_11, %c0_12, %c0_13], %33 {strides = array<i32>} : memref<1x8x32xf32, #tpu.memory_space<vmem>>, vector<1x8x32xf32>,
    } else {
    }
    return
  }
  func.func @transform_0(%arg0: i32, %arg1: i32, %arg2: i32, %arg3: i32) -> (i32, i32, i32, i32) {
    %c0_i32 = arith.constant 0 : i32
    %c0_i32_0 = arith.constant 0 : i32
    return %arg0, %arg1, %arg2, %c0_i32 : i32, i32, i32, i32
  }
  func.func @transform_1(%arg0: i32, %arg1: i32, %arg2: i32, %arg3: i32) -> (i32, i32, i32, i32) {
    %c0_i32 = arith.constant 0 : i32
    %c0_i32_0 = arith.constant 0 : i32
    return %arg0, %arg1, %arg3, %c0_i32 : i32, i32, i32, i32
  }
  func.func @transform_2(%arg0: i32, %arg1: i32, %arg2: i32, %arg3: i32) -> (i32, i32, i32, i32) {
    %c0_i32 = arith.constant 0 : i32
    %c0_i32_0 = arith.constant 0 : i32
    return %arg0, %arg1, %arg3, %c0_i32 : i32, i32, i32, i32
  }
  func.func @transform_3(%arg0: i32, %arg1: i32, %arg2: i32, %arg3: i32) -> (i32, i32, i32) {
    %c0_i32 = arith.constant 0 : i32
    return %arg0, %arg2, %arg1 : i32, i32, i32
  }
}

</mosaic_0001>

<llo_original>
// kernel: tpu_custom_call.1
$region0: #{tpu_custom_call.1}
  #allocation0 [shape = 'u32[]', space=smem, size = 0x4, offset = 0x4, fixed_abs, tag = 'smem constant byte address 0x4 - core index']
  #allocation1 [shape = 'u32[144,128]{1,0:T(1,128)}', space=vmem, size = 0x12000, scoped, tag = 'internal scratch']
  #allocation2 [shape = 'f32[4,8,1]{2,1,0:T(8,128)}', space=vmem, size = 0x4000, scoped, tag = 'scratch operand']
  #allocation3 [shape = 'f32[4,8,1]{2,1,0:T(8,128)}', space=vmem, size = 0x4000, scoped, tag = 'scratch operand']
  #allocation4 [shape = 'f32[4,8,8]{2,1,0:T(8,128)}', space=vmem, size = 0x4000, scoped, tag = 'scratch operand']
  #allocation5 [shape = 'f32[4,8,8]{2,1,0:T(8,128)}', space=vmem, size = 0x4000, scoped, tag = 'scratch operand']
  %s0 = inlined_call_operand.vmem [shape: f32[2,4,8,8], index: 0, kind: input, shape index: {}]
  %s1 = inlined_call_operand.vmem [shape: f32[2,4,16,8], index: 1, kind: input, shape index: {}]
  %s2 = inlined_call_operand.vmem [shape: f32[2,4,16,8], index: 2, kind: input, shape index: {}]
  %s3 = inlined_call_operand.hbm [shape: f32[2,8,32], index: 3, kind: output, shape index: {}]
  %s4 = sld [smem:[#allocation0]]
  $region57: #{tpu_custom_call.1} parent=0
    _
  %s6 = ssub.s32 1, %s4
  %s7 = scalar_select 0, %s6, %s4
  $region1: #{tpu_custom_call.1} parent=0
    #allocation6 [shape = 'u8[8192]{0}', space=vmem, size = 0x2000, scoped, tag = 'output window, operand 0']
    #allocation7 [shape = 's32[2]{0}', space=sflag, size = 0x8, scoped, tag = 'scoped memory for tpu_custom_call.1']
    %8 = vsyncpa [#allocation7], 0
    %s9 = scalar_lea.sflag [#allocation7], 1
    %10 = vsyncpa %s9, 0
    loop: start=0, step=1, limit=4
    $region2: #{tpu_custom_call.1} parent=1 // loop_pre_header
      _
    $region3: #{tpu_custom_call.1} parent=1 // loop_header
      %s12 = sphi 0, %s16
      %p13 = scmp.ge.s32.totalorder %s12, 4
      %s19 = sphi 0, %s45
      %s20 = sphi 0, %s41
      %s21 = sphi 0, %s37
      %s22 = sphi 0, %s33
      %s23 = sphi 0, %s19
      %s24 = sphi 0, %s20
      %s25 = sphi 0, %s21
      %s26 = sphi 0, %s22
      %s27 = sphi 0, %s23
      %s28 = sphi 0, %s24
      %s29 = sphi 0, %s25
      %s30 = sphi 0, %s26
      %s52 = sphi 0, %s54
      %s55 = sphi 0, %s52
      %s56 = sphi 0, %s55
      %s72 = sphi 0, %s56
      %s82 = sphi 0, %s84
      %s85 = sphi 0, %s82
      %s86 = sphi 0, %s85
      %s102 = sphi 0, %s86
      %s112 = sphi 0, %s114
      %s115 = sphi 0, %s112
      %s116 = sphi 0, %s115
      %s132 = sphi 0, %s116
      %s142 = sphi 0, %s144
      %s145 = sphi 0, %s142
      %s146 = sphi 0, %s145
      %s162 = sphi 0, %s146
    $region4: #{tpu_custom_call.1} parent=1 // loop_header_branch
      %15 = sbr.rel (%p13) target = $region8
    $region5: #{tpu_custom_call.1} parent=1 // loop_body
      %s17 = ssub.s32 %s12, 1
      %s18 = ssub.s32 %s12, 2
      %s31 = sadd.s32 1, %s22
      %p32 = scmp.ge.s32.totalorder %s31, 1
      %s33 = scalar_select %p32, 0, %s31
      %s34 = sadd.s32 1, %s21
      %s35 = scalar_select %p32, %s34, %s21
      %p36 = scmp.ge.s32.totalorder %s35, 1
      %s37 = scalar_select %p36, 0, %s35
      %s38 = sadd.s32 1, %s20
      %s39 = scalar_select %p36, %s38, %s20
      %p40 = scmp.ge.s32.totalorder %s39, 1
      %s41 = scalar_select %p40, 0, %s39
      %s42 = sadd.s32 1, %s19
      %s43 = scalar_select %p40, %s42, %s19
      %p44 = scmp.ge.s32.totalorder %s43, 2
      %s45 = scalar_select %p44, 0, %s43
      %s46 = ssub.s32 %s19, %s45
      %s47 = ssub.s32 %s20, %s41
      %s48 = sor.u32 %s46, %s47
      %s49 = ssub.s32 %s21, %s37
      %s50 = sor.u32 %s48, %s49
      %p51 = scmp.eq.s32.totalorder %s50, 0
      %s53 = sadd.s32 %s52, 1
      %s54 = scalar_select %p51, %s52, %s53
      %p57 = pneg %p51
      %p58 = scmp.eq.s32.totalorder %s12, 1
      %p59 = por %p57, %p58
      %p60 = scmp.ne.s32.totalorder %s52, %s55
      %p61 = scmp.eq.s32.totalorder %s12, 0
      %p62 = por %p60, %p61
      %p63 = scmp.ne.s32.totalorder %s52, %s55
      %p64 = scmp.eq.s32.totalorder %s17, 1
      %p65 = por %p63, %p64
      %p66 = scmp.ne.s32.totalorder %s55, %s56
      %p67 = scmp.eq.s32.totalorder %s17, 0
      %p68 = por %p66, %p67
      %p69 = scmp.ne.s32.totalorder %s55, %s56
      %p70 = scmp.eq.s32.totalorder %s18, 1
      %p71 = por %p69, %p70
      %p73 = scmp.ne.s32.totalorder %s56, %s72
      %p74 = scmp.eq.s32.totalorder %s18, 0
      %p75 = por %p73, %p74
      %s76 = ssub.s32 %s19, %s45
      %s77 = ssub.s32 %s20, %s41
      %s78 = sor.u32 %s76, %s77
      %s79 = ssub.s32 %s22, %s33
      %s80 = sor.u32 %s78, %s79
      %p81 = scmp.eq.s32.totalorder %s80, 0
      %s83 = sadd.s32 %s82, 1
      %s84 = scalar_select %p81, %s82, %s83
      %p87 = pneg %p81
      %p88 = scmp.eq.s32.totalorder %s12, 1
      %p89 = por %p87, %p88
      %p90 = scmp.ne.s32.totalorder %s82, %s85
      %p91 = scmp.eq.s32.totalorder %s12, 0
      %p92 = por %p90, %p91
      %p93 = scmp.ne.s32.totalorder %s82, %s85
      %p94 = scmp.eq.s32.totalorder %s17, 1
      %p95 = por %p93, %p94
      %p96 = scmp.ne.s32.totalorder %s85, %s86
      %p97 = scmp.eq.s32.totalorder %s17, 0
      %p98 = por %p96, %p97
      %p99 = scmp.ne.s32.totalorder %s85, %s86
      %p100 = scmp.eq.s32.totalorder %s18, 1
      %p101 = por %p99, %p100
      %p103 = scmp.ne.s32.totalorder %s86, %s102
      %p104 = scmp.eq.s32.totalorder %s18, 0
      %p105 = por %p103, %p104
      %s106 = ssub.s32 %s19, %s45
      %s107 = ssub.s32 %s20, %s41
      %s108 = sor.u32 %s106, %s107
      %s109 = ssub.s32 %s22, %s33
      %s110 = sor.u32 %s108, %s109
      %p111 = scmp.eq.s32.totalorder %s110, 0
      %s113 = sadd.s32 %s112, 1
      %s114 = scalar_select %p111, %s112, %s113
      %p117 = pneg %p111
      %p118 = scmp.eq.s32.totalorder %s12, 1
      %p119 = por %p117, %p118
      %p120 = scmp.ne.s32.totalorder %s112, %s115
      %p121 = scmp.eq.s32.totalorder %s12, 0
      %p122 = por %p120, %p121
      %p123 = scmp.ne.s32.totalorder %s112, %s115
      %p124 = scmp.eq.s32.totalorder %s17, 1
      %p125 = por %p123, %p124
      %p126 = scmp.ne.s32.totalorder %s115, %s116
      %p127 = scmp.eq.s32.totalorder %s17, 0
      %p128 = por %p126, %p127
      %p129 = scmp.ne.s32.totalorder %s115, %s116
      %p130 = scmp.eq.s32.totalorder %s18, 1
      %p131 = por %p129, %p130
      %p133 = scmp.ne.s32.totalorder %s116, %s132
      %p134 = scmp.eq.s32.totalorder %s18, 0
      %p135 = por %p133, %p134
      %s136 = ssub.s32 %s19, %s45
      %s137 = ssub.s32 %s21, %s37
      %s138 = sor.u32 %s136, %s137
      %s139 = ssub.s32 %s20, %s41
      %s140 = sor.u32 %s138, %s139
      %p141 = scmp.eq.s32.totalorder %s140, 0
      %s143 = sadd.s32 %s142, 1
      %s144 = scalar_select %p141, %s142, %s143
      %p147 = pneg %p141
      %p148 = scmp.eq.s32.totalorder %s12, 1
      %p149 = por %p147, %p148
      %p150 = scmp.ne.s32.totalorder %s142, %s145
      %p151 = scmp.eq.s32.totalorder %s12, 0
      %p152 = por %p150, %p151
      %p153 = scmp.ne.s32.totalorder %s142, %s145
      %p154 = scmp.eq.s32.totalorder %s17, 1
      %p155 = por %p153, %p154
      %p156 = scmp.ne.s32.totalorder %s145, %s146
      %p157 = scmp.eq.s32.totalorder %s17, 0
      %p158 = por %p156, %p157
      %p159 = scmp.ne.s32.totalorder %s145, %s146
      %p160 = scmp.eq.s32.totalorder %s18, 1
      %p161 = por %p159, %p160
      %p163 = scmp.ne.s32.totalorder %s146, %s162
      %p164 = scmp.eq.s32.totalorder %s18, 0
      %p165 = por %p163, %p164
      %p166 = scmp.le.s32.totalorder 1, %s12
      %p167 = scmp.lt.s32.totalorder %s12, 3
      %p168 = pnand %p166, %p167
      %p169 = pneg %p168
      // Predicated region
      $region9: #{tpu_custom_call.1} parent=5 // pred_check
        _
      $region10: #{tpu_custom_call.1} parent=5 // pred_check_branch
        %171 = sbr.rel (%p168) target = $region12
      $region11: #{tpu_custom_call.1} parent=5 // pred_region
        %s172 = ssub.s32 %s12, 1
      $region12: #{tpu_custom_call.1} parent=5 // pred_fallthru
        _
      %p173 = scmp.lt.s32.totalorder %s12, 2
      // Predicated region
      $region13: #{tpu_custom_call.1} parent=5 // pred_check
        %p174 = pneg %p173
      $region14: #{tpu_custom_call.1} parent=5 // pred_check_branch
        %176 = sbr.rel (%p174) target = $region16
      $region15: #{tpu_custom_call.1} parent=5 // pred_region
        // Predicated region
        $region17: #{tpu_custom_call.1} parent=15 // pred_check
          %p177 = pneg %p62
        $region18: #{tpu_custom_call.1} parent=15 // pred_check_branch
          %179 = sbr.rel (%p177) target = $region20
        $region19: #{tpu_custom_call.1} parent=15 // pred_region
          %s180 = smul.u32 4, %s20
          %p181 = scmp.lt.s32.totalorder %s19, 1
          %s182 = scalar_select %p181, %s19, 1
          %p183 = scmp.lt.s32.totalorder %s180, 3
          %s184 = scalar_select %p183, %s180, 3
          %p185 = scmp.lt.s32.totalorder %s21, 0
          %s186 = scalar_select %p185, %s21, 0
          %s187 = sadd.s32 %s186, %s184
          %s188 = smul.addr %s182, 4
          %s189 = sadd.s32 %s187, %s188
          %s190 = smul.addr %s189, 8
          %s191 = scalar_lea.vmem %s0, %s190
          %s192 = smul.u32 4, %s20
        $region20: #{tpu_custom_call.1} parent=15 // pred_fallthru
          _
        // Predicated region
        $region21: #{tpu_custom_call.1} parent=15 // pred_check
          %p193 = pneg %p92
        $region22: #{tpu_custom_call.1} parent=15 // pred_check_branch
          %195 = sbr.rel (%p193) target = $region24
        $region23: #{tpu_custom_call.1} parent=15 // pred_region
          %s196 = smul.u32 4, %s20
          %s197 = smul.u32 2, %s22
          %p198 = scmp.lt.s32.totalorder %s19, 1
          %s199 = scalar_select %p198, %s19, 1
          %p200 = scmp.lt.s32.totalorder %s196, 3
          %s201 = scalar_select %p200, %s196, 3
          %p202 = scmp.lt.s32.totalorder %s197, 1
          %s203 = scalar_select %p202, %s197, 1
          %s204 = smul.addr %s201, 2
          %s205 = sadd.s32 %s203, %s204
          %s206 = smul.addr %s199, 8
          %s207 = sadd.s32 %s205, %s206
          %s208 = smul.addr %s207, 8
          %s209 = scalar_lea.vmem %s1, %s208
          %s210 = smul.u32 4, %s20
          %s211 = smul.u32 2, %s22
        $region24: #{tpu_custom_call.1} parent=15 // pred_fallthru
          _
        // Predicated region
        $region25: #{tpu_custom_call.1} parent=15 // pred_check
          %p212 = pneg %p122
        $region26: #{tpu_custom_call.1} parent=15 // pred_check_branch
          %214 = sbr.rel (%p212) target = $region28
        $region27: #{tpu_custom_call.1} parent=15 // pred_region
          %s215 = smul.u32 4, %s20
          %s216 = smul.u32 2, %s22
          %p217 = scmp.lt.s32.totalorder %s19, 1
          %s218 = scalar_select %p217, %s19, 1
          %p219 = scmp.lt.s32.totalorder %s215, 3
          %s220 = scalar_select %p219, %s215, 3
          %p221 = scmp.lt.s32.totalorder %s216, 1
          %s222 = scalar_select %p221, %s216, 1
          %s223 = smul.addr %s220, 2
          %s224 = sadd.s32 %s222, %s223
          %s225 = smul.addr %s218, 8
          %s226 = sadd.s32 %s224, %s225
          %s227 = smul.addr %s226, 8
          %s228 = scalar_lea.vmem %s2, %s227
          %s229 = smul.u32 4, %s20
          %s230 = smul.u32 2, %s22
        $region28: #{tpu_custom_call.1} parent=15 // pred_fallthru
          _
      $region16: #{tpu_custom_call.1} parent=5 // pred_fallthru
        _
      %p231 = scmp.le.s32.totalorder 1, %s12
      %p232 = scmp.lt.s32.totalorder %s12, 3
      %p233 = pnand %p231, %p232
      %p234 = pneg %p233
      // Predicated region
      $region29: #{tpu_custom_call.1} parent=5 // pred_check
        _
      $region30: #{tpu_custom_call.1} parent=5 // pred_check_branch
        %236 = sbr.rel (%p233) target = $region32
      $region31: #{tpu_custom_call.1} parent=5 // pred_region
        %s237 = ssub.s32 %s12, 1
        %s238 = smul.u32 4, %s24
        %p239 = scmp.lt.s32.totalorder %s23, 1
        %s240 = scalar_select %p239, %s23, 1
        %p241 = scmp.lt.s32.totalorder %s238, 3
        %s242 = scalar_select %p241, %s238, 3
        %p243 = scmp.lt.s32.totalorder %s25, 0
        %s244 = scalar_select %p243, %s25, 0
        %s245 = sadd.s32 %s244, %s242
        %s246 = smul.addr %s240, 4
        %s247 = sadd.s32 %s245, %s246
        %s248 = smul.addr %s247, 8
        %s249 = scalar_lea.vmem %s0, %s248
        %p250 = pneg %p68
        %p251 = pneg %p65
        %s252 = smul.u32 4, %s24
        %s253 = smul.u32 2, %s26
        %p254 = scmp.lt.s32.totalorder %s23, 1
        %s255 = scalar_select %p254, %s23, 1
        %p256 = scmp.lt.s32.totalorder %s252, 3
        %s257 = scalar_select %p256, %s252, 3
        %p258 = scmp.lt.s32.totalorder %s253, 1
        %s259 = scalar_select %p258, %s253, 1
        %s260 = smul.addr %s257, 2
        %s261 = sadd.s32 %s259, %s260
        %s262 = smul.addr %s255, 8
        %s263 = sadd.s32 %s261, %s262
        %s264 = smul.addr %s263, 8
        %s265 = scalar_lea.vmem %s1, %s264
        %p266 = pneg %p98
        %p267 = pneg %p95
        %s268 = smul.u32 4, %s24
        %s269 = smul.u32 2, %s26
        %p270 = scmp.lt.s32.totalorder %s23, 1
        %s271 = scalar_select %p270, %s23, 1
        %p272 = scmp.lt.s32.totalorder %s268, 3
        %s273 = scalar_select %p272, %s268, 3
        %p274 = scmp.lt.s32.totalorder %s269, 1
        %s275 = scalar_select %p274, %s269, 1
        %s276 = smul.addr %s273, 2
        %s277 = sadd.s32 %s275, %s276
        %s278 = smul.addr %s271, 8
        %s279 = sadd.s32 %s277, %s278
        %s280 = smul.addr %s279, 8
        %s281 = scalar_lea.vmem %s2, %s280
        %p282 = pneg %p128
        %p283 = pneg %p125
        %p284 = pneg %p158
        %p285 = pneg %p155
        %s286 = sand.u32 %s145, 1
        %s287 = scalar_lea.sflag [#allocation7], %s286
        %s288 = sand.u32 %s145, 1
        %s289 = smul.addr %s288, 8
        %s290 = scalar_lea.vmem [#allocation6], %s289
        %s291 = smul.u32 4, %s24
        %p292 = scmp.lt.s32.totalorder %s23, 1
        %s293 = scalar_select %p292, %s23, 1
        %p294 = scmp.lt.s32.totalorder %s291, 3
        %s295 = scalar_select %p294, %s291, 3
        %p296 = scmp.lt.s32.totalorder %s25, 0
        %s297 = scalar_select %p296, %s25, 0
        %s298 = sadd.s32 %s297, %s295
        %s299 = smul.addr %s293, 4
        %s300 = sadd.s32 %s298, %s299
        %s301 = smul.addr %s300, 8
        %s302 = scalar_lea.vmem %s0, %s301
        %s303 = smul.u32 4, %s24
        %s304 = smul.u32 4, %s24
        %s305 = smul.u32 2, %s26
        %p306 = scmp.lt.s32.totalorder %s23, 1
        %s307 = scalar_select %p306, %s23, 1
        %p308 = scmp.lt.s32.totalorder %s304, 3
        %s309 = scalar_select %p308, %s304, 3
        %p310 = scmp.lt.s32.totalorder %s305, 1
        %s311 = scalar_select %p310, %s305, 1
        %s312 = smul.addr %s309, 2
        %s313 = sadd.s32 %s311, %s312
        %s314 = smul.addr %s307, 8
        %s315 = sadd.s32 %s313, %s314
        %s316 = smul.addr %s315, 8
        %s317 = scalar_lea.vmem %s1, %s316
        %s318 = smul.u32 4, %s24
        %s319 = smul.u32 2, %s26
        %s320 = smul.u32 4, %s24
        %s321 = smul.u32 2, %s26
        %p322 = scmp.lt.s32.totalorder %s23, 1
        %s323 = scalar_select %p322, %s23, 1
        %p324 = scmp.lt.s32.totalorder %s320, 3
        %s325 = scalar_select %p324, %s320, 3
        %p326 = scmp.lt.s32.totalorder %s321, 1
        %s327 = scalar_select %p326, %s321, 1
        %s328 = smul.addr %s325, 2
        %s329 = sadd.s32 %s327, %s328
        %s330 = smul.addr %s323, 8
        %s331 = sadd.s32 %s329, %s330
        %s332 = smul.addr %s331, 8
        %s333 = scalar_lea.vmem %s2, %s332
        %s334 = smul.u32 4, %s24
        %s335 = smul.u32 2, %s26
        %p336 = scmp.eq.s32.totalorder %s26, 0
        // Predicated region
        $region33: #{tpu_custom_call.1} parent=31 // pred_check
          %p337 = pneg %p336
        $region34: #{tpu_custom_call.1} parent=31 // pred_check_branch
          %339 = sbr.rel (%p337) target = $region36
        $region35: #{tpu_custom_call.1} parent=31 // pred_region
          %vm340 = vcmask 7168
          %341 = vst.msk [vmem:[#allocation2] sm:$0xff] %vm340, -1e+30
          %342 = vst.msk [vmem:[#allocation2 + $0x8] sm:$0xff] %vm340, -1e+30
          %343 = vst.msk [vmem:[#allocation2 + $0x10] sm:$0xff] %vm340, -1e+30
          %344 = vst.msk [vmem:[#allocation2 + $0x18] sm:$0xff] %vm340, -1e+30
          %345 = vst.msk [vmem:[#allocation3] sm:$0xff] %vm340, 0.0
          %346 = vst.msk [vmem:[#allocation3 + $0x8] sm:$0xff] %vm340, 0.0
          %347 = vst.msk [vmem:[#allocation3 + $0x10] sm:$0xff] %vm340, 0.0
          %348 = vst.msk [vmem:[#allocation3 + $0x18] sm:$0xff] %vm340, 0.0
          %vm349 = vcmask 64512
          %350 = vst.msk [vmem:[#allocation4] sm:$0xff] %vm349, 0.0
          %351 = vst.msk [vmem:[#allocation4 + $0x8] sm:$0xff] %vm349, 0.0
          %352 = vst.msk [vmem:[#allocation4 + $0x10] sm:$0xff] %vm349, 0.0
          %353 = vst.msk [vmem:[#allocation4 + $0x18] sm:$0xff] %vm349, 0.0
          %v354 = vld [vmem:[%s302] sm:$0xff]
          %v355 = vld [vmem:[%s302 + $0x8] sm:$0xff]
          %v356 = vld [vmem:[%s302 + $0x10] sm:$0xff]
          %v357 = vld [vmem:[%s302 + $0x18] sm:$0xff]
          %v358 = vmul.f32 %v354, 0.35355338
          %v359 = vmul.f32 %v355, 0.35355338
          %v360 = vmul.f32 %v356, 0.35355338
          %v361 = vmul.f32 %v357, 0.35355338
          %362 = vst.msk [vmem:[#allocation5] sm:$0xff] %vm349, %v358
          %363 = vst.msk [vmem:[#allocation5 + $0x8] sm:$0xff] %vm349, %v359
          %364 = vst.msk [vmem:[#allocation5 + $0x10] sm:$0xff] %vm349, %v360
          %365 = vst.msk [vmem:[#allocation5 + $0x18] sm:$0xff] %vm349, %v361
        $region36: #{tpu_custom_call.1} parent=31 // pred_fallthru
          _
        %s366 = smul.u32 %s26, 16
        %s367 = sadd.s32 %s25, 1
        %s368 = smul.u32 %s367, 8
        %p369 = scmp.gt.s32.totalorder %s368, 3
        %s370 = scalar_select %p369, %s368, 3
        %s371 = sadd.s32 %s370, 8
        %p372 = scmp.ge.s32.totalorder %s366, %s371
        %p373 = scmp.ge.s32.totalorder %s366, 16
        %p374 = por %p372, %p373
        %p375 = pneg %p374
        // Predicated region
        $region37: #{tpu_custom_call.1} parent=31 // pred_check
          _
        $region38: #{tpu_custom_call.1} parent=31 // pred_check_branch
          %377 = sbr.rel (%p374) target = $region40
        $region39: #{tpu_custom_call.1} parent=31 // pred_region
          %v378 = vld [vmem:[#allocation5] sm:$0xff]
          %v379 = vld [vmem:[#allocation5 + $0x8] sm:$0xff]
          %v380 = vld [vmem:[#allocation5 + $0x10] sm:$0xff]
          %v381 = vld [vmem:[#allocation5 + $0x18] sm:$0xff]
          %v382 = vld [vmem:[%s317] sm:$0xff]
          %v383 = vld [vmem:[%s317 + $0x8] sm:$0xff]
          %v384 = vld [vmem:[%s317 + $0x10] sm:$0xff]
          %v385 = vld [vmem:[%s317 + $0x18] sm:$0xff]
          %v386 = vld [vmem:[%s317 + $0x20] sm:$0xff]
          %v387 = vld [vmem:[%s317 + $0x28] sm:$0xff]
          %v388 = vld [vmem:[%s317 + $0x30] sm:$0xff]
          %v389 = vld [vmem:[%s317 + $0x38] sm:$0xff]
          %v390 = vld [vmem:[%s333] sm:$0xff]
          %v391 = vld [vmem:[%s333 + $0x8] sm:$0xff]
          %v392 = vld [vmem:[%s333 + $0x10] sm:$0xff]
          %v393 = vld [vmem:[%s333 + $0x18] sm:$0xff]
          %v394 = vld [vmem:[%s333 + $0x20] sm:$0xff]
          %v395 = vld [vmem:[%s333 + $0x28] sm:$0xff]
          %v396 = vld [vmem:[%s333 + $0x30] sm:$0xff]
          %v397 = vld [vmem:[%s333 + $0x38] sm:$0xff]
          %vm398 = vcmask 64512
          %v400 = vsel %vm398, %v378, 0
          %v403 = vsel %vm398, %v382, 0
          %v406 = vsel %vm398, %v383, 0
          %408 = vmatprep.subr.mxu0 0.0
          %409 = vmatpush1.xpose.msra.mxu0 0.0
          %410 = vmatprep.subr.mxu0 0.0
          %411 = vmatpush1.xpose.msra.mxu0 0.0
          %412 = vmatprep.subr.mxu0 0.0
          %413 = vmatpush1.xpose.msra.mxu0 0.0
          %414 = vmatprep.subr.mxu0 0.0
          %415 = vmatpush1.xpose.msra.mxu0 0.0
          %416 = vmatprep.subr.mxu0 0.0
          %417 = vmatpush1.xpose.msra.mxu0 0.0
          %418 = vmatprep.subr.mxu0 0.0
          %419 = vmatpush1.xpose.msra.mxu0 0.0
          %420 = vmatprep.subr.mxu0 0.0
          %421 = vmatpush1.xpose.msra.mxu0 0.0
          %422 = vmatprep.subr.mxu0 0.0
          %423 = vmatpush1.xpose.msra.mxu0 0.0
          %424 = vmatprep.subr.mxu0 0.0
          %425 = vmatpush1.xpose.msra.mxu0 0.0
          %426 = vmatprep.subr.mxu0 0.0
          %427 = vmatpush1.xpose.msra.mxu0 0.0
          %428 = vmatprep.subr.mxu0 0.0
          %429 = vmatpush1.xpose.msra.mxu0 0.0
          %430 = vmatprep.subr.mxu0 0.0
          %431 = vmatpush1.xpose.msra.mxu0 0.0
          %432 = vmatprep.subr.mxu0 0.0
          %433 = vmatpush1.xpose.msra.mxu0 0.0
          %434 = vmatprep.subr.mxu0 0.0
          %435 = vmatpush1.xpose.msra.mxu0 0.0
          %436 = vmatprep.subr.mxu0 0.0
          %437 = vmatpush1.xpose.msra.mxu0 %v406
          %438 = vmatprep.subr.mxu0 0.0
          %439 = vmatpush1.xpose.msra.mxu0 %v403
          %440 = vmatprep.subr.mxu0 0.0
          %441 = vmatpush2.xpose.msra.mxu0 0.0
          %442 = vmatprep.subr.mxu0 0.0
          %443 = vmatpush2.xpose.msra.mxu0 0.0
          %444 = vmatprep.subr.mxu0 0.0
          %445 = vmatpush2.xpose.msra.mxu0 0.0
          %446 = vmatprep.subr.mxu0 0.0
          %447 = vmatpush2.xpose.msra.mxu0 0.0
          %448 = vmatprep.subr.mxu0 0.0
          %449 = vmatpush2.xpose.msra.mxu0 0.0
          %450 = vmatprep.subr.mxu0 0.0
          %451 = vmatpush2.xpose.msra.mxu0 0.0
          %452 = vmatprep.subr.mxu0 0.0
          %453 = vmatpush2.xpose.msra.mxu0 0.0
          %454 = vmatprep.subr.mxu0 0.0
          %455 = vmatpush2.xpose.msra.mxu0 0.0
          %456 = vmatprep.subr.mxu0 0.0
          %457 = vmatpush2.xpose.msra.mxu0 0.0
          %458 = vmatprep.subr.mxu0 0.0
          %459 = vmatpush2.xpose.msra.mxu0 0.0
          %460 = vmatprep.subr.mxu0 0.0
          %461 = vmatpush2.xpose.msra.mxu0 0.0
          %462 = vmatprep.subr.mxu0 0.0
          %463 = vmatpush2.xpose.msra.mxu0 0.0
          %464 = vmatprep.subr.mxu0 0.0
          %465 = vmatpush2.xpose.msra.mxu0 0.0
          %466 = vmatprep.subr.mxu0 0.0
          %467 = vmatpush2.xpose.msra.mxu0 0.0
          %468 = vmatprep.subr.mxu0 0.0
          %469 = vmatpush2.xpose.msra.mxu0 0.0
          %470 = vmatprep.subr.mxu0 0.0
          %471 = vmatpush2.xpose.msra.mxu0 0.0
          %472 = vmatprep.mubr.f32.mxu0 0.0
          %473 = vmatmul.mubr.f32.gmra.mxu0 %v400
          %v474 = vpop.f32.mrf.mxu0
          %v475 = vadd.f32 0.0, %v474
          %v476 = vpop.f32.mrf.mxu0
          %477 = vdwg.mxu0
          %v479 = vsel %vm398, %v379, 0
          %v482 = vsel %vm398, %v384, 0
          %v485 = vsel %vm398, %v385, 0
          %487 = vmatprep.subr.mxu0 0.0
          %488 = vmatpush1.xpose.msra.mxu0 0.0
          %489 = vmatprep.subr.mxu0 0.0
          %490 = vmatpush1.xpose.msra.mxu0 0.0
          %491 = vmatprep.subr.mxu0 0.0
          %492 = vmatpush1.xpose.msra.mxu0 0.0
          %493 = vmatprep.subr.mxu0 0.0
          %494 = vmatpush1.xpose.msra.mxu0 0.0
          %495 = vmatprep.subr.mxu0 0.0
          %496 = vmatpush1.xpose.msra.mxu0 0.0
          %497 = vmatprep.subr.mxu0 0.0
          %498 = vmatpush1.xpose.msra.mxu0 0.0
          %499 = vmatprep.subr.mxu0 0.0
          %500 = vmatpush1.xpose.msra.mxu0 0.0
          %501 = vmatprep.subr.mxu0 0.0
          %502 = vmatpush1.xpose.msra.mxu0 0.0
          %503 = vmatprep.subr.mxu0 0.0
          %504 = vmatpush1.xpose.msra.mxu0 0.0
          %505 = vmatprep.subr.mxu0 0.0
          %506 = vmatpush1.xpose.msra.mxu0 0.0
          %507 = vmatprep.subr.mxu0 0.0
          %508 = vmatpush1.xpose.msra.mxu0 0.0
          %509 = vmatprep.subr.mxu0 0.0
          %510 = vmatpush1.xpose.msra.mxu0 0.0
          %511 = vmatprep.subr.mxu0 0.0
          %512 = vmatpush1.xpose.msra.mxu0 0.0
          %513 = vmatprep.subr.mxu0 0.0
          %514 = vmatpush1.xpose.msra.mxu0 0.0
          %515 = vmatprep.subr.mxu0 0.0
          %516 = vmatpush1.xpose.msra.mxu0 %v485
          %517 = vmatprep.subr.mxu0 0.0
          %518 = vmatpush1.xpose.msra.mxu0 %v482
          %519 = vmatprep.subr.mxu0 0.0
          %520 = vmatpush2.xpose.msra.mxu0 0.0
          %521 = vmatprep.subr.mxu0 0.0
          %522 = vmatpush2.xpose.msra.mxu0 0.0
          %523 = vmatprep.subr.mxu0 0.0
          %524 = vmatpush2.xpose.msra.mxu0 0.0
          %525 = vmatprep.subr.mxu0 0.0
          %526 = vmatpush2.xpose.msra.mxu0 0.0
          %527 = vmatprep.subr.mxu0 0.0
          %528 = vmatpush2.xpose.msra.mxu0 0.0
          %529 = vmatprep.subr.mxu0 0.0
          %530 = vmatpush2.xpose.msra.mxu0 0.0
          %531 = vmatprep.subr.mxu0 0.0
          %532 = vmatpush2.xpose.msra.mxu0 0.0
          %533 = vmatprep.subr.mxu0 0.0
          %534 = vmatpush2.xpose.msra.mxu0 0.0
          %535 = vmatprep.subr.mxu0 0.0
          %536 = vmatpush2.xpose.msra.mxu0 0.0
          %537 = vmatprep.subr.mxu0 0.0
          %538 = vmatpush2.xpose.msra.mxu0 0.0
          %539 = vmatprep.subr.mxu0 0.0
          %540 = vmatpush2.xpose.msra.mxu0 0.0
          %541 = vmatprep.subr.mxu0 0.0
          %542 = vmatpush2.xpose.msra.mxu0 0.0
          %543 = vmatprep.subr.mxu0 0.0
          %544 = vmatpush2.xpose.msra.mxu0 0.0
          %545 = vmatprep.subr.mxu0 0.0
          %546 = vmatpush2.xpose.msra.mxu0 0.0
          %547 = vmatprep.subr.mxu0 0.0
          %548 = vmatpush2.xpose.msra.mxu0 0.0
          %549 = vmatprep.subr.mxu0 0.0
          %550 = vmatpush2.xpose.msra.mxu0 0.0
          %551 = vmatprep.mubr.f32.mxu0 0.0
          %552 = vmatmul.mubr.f32.gmra.mxu0 %v479
          %v553 = vpop.f32.mrf.mxu0
          %v554 = vadd.f32 0.0, %v553
          %v555 = vpop.f32.mrf.mxu0
          %556 = vdwg.mxu0
          %v558 = vsel %vm398, %v380, 0
          %v561 = vsel %vm398, %v386, 0
          %v564 = vsel %vm398, %v387, 0
          %566 = vmatprep.subr.mxu0 0.0
          %567 = vmatpush1.xpose.msra.mxu0 0.0
          %568 = vmatprep.subr.mxu0 0.0
          %569 = vmatpush1.xpose.msra.mxu0 0.0
          %570 = vmatprep.subr.mxu0 0.0
          %571 = vmatpush1.xpose.msra.mxu0 0.0
          %572 = vmatprep.subr.mxu0 0.0
          %573 = vmatpush1.xpose.msra.mxu0 0.0
          %574 = vmatprep.subr.mxu0 0.0
          %575 = vmatpush1.xpose.msra.mxu0 0.0
          %576 = vmatprep.subr.mxu0 0.0
          %577 = vmatpush1.xpose.msra.mxu0 0.0
          %578 = vmatprep.subr.mxu0 0.0
          %579 = vmatpush1.xpose.msra.mxu0 0.0
          %580 = vmatprep.subr.mxu0 0.0
          %581 = vmatpush1.xpose.msra.mxu0 0.0
          %582 = vmatprep.subr.mxu0 0.0
          %583 = vmatpush1.xpose.msra.mxu0 0.0
          %584 = vmatprep.subr.mxu0 0.0
          %585 = vmatpush1.xpose.msra.mxu0 0.0
          %586 = vmatprep.subr.mxu0 0.0
          %587 = vmatpush1.xpose.msra.mxu0 0.0
          %588 = vmatprep.subr.mxu0 0.0
          %589 = vmatpush1.xpose.msra.mxu0 0.0
          %590 = vmatprep.subr.mxu0 0.0
          %591 = vmatpush1.xpose.msra.mxu0 0.0
          %592 = vmatprep.subr.mxu0 0.0
          %593 = vmatpush1.xpose.msra.mxu0 0.0
          %594 = vmatprep.subr.mxu0 0.0
          %595 = vmatpush1.xpose.msra.mxu0 %v564
          %596 = vmatprep.subr.mxu0 0.0
          %597 = vmatpush1.xpose.msra.mxu0 %v561
          %598 = vmatprep.subr.mxu0 0.0
          %599 = vmatpush2.xpose.msra.mxu0 0.0
          %600 = vmatprep.subr.mxu0 0.0
          %601 = vmatpush2.xpose.msra.mxu0 0.0
          %602 = vmatprep.subr.mxu0 0.0
          %603 = vmatpush2.xpose.msra.mxu0 0.0
          %604 = vmatprep.subr.mxu0 0.0
          %605 = vmatpush2.xpose.msra.mxu0 0.0
          %606 = vmatprep.subr.mxu0 0.0
          %607 = vmatpush2.xpose.msra.mxu0 0.0
          %608 = vmatprep.subr.mxu0 0.0
          %609 = vmatpush2.xpose.msra.mxu0 0.0
          %610 = vmatprep.subr.mxu0 0.0
          %611 = vmatpush2.xpose.msra.mxu0 0.0
          %612 = vmatprep.subr.mxu0 0.0
          %613 = vmatpush2.xpose.msra.mxu0 0.0
          %614 = vmatprep.subr.mxu0 0.0
          %615 = vmatpush2.xpose.msra.mxu0 0.0
          %616 = vmatprep.subr.mxu0 0.0
          %617 = vmatpush2.xpose.msra.mxu0 0.0
          %618 = vmatprep.subr.mxu0 0.0
          %619 = vmatpush2.xpose.msra.mxu0 0.0
          %620 = vmatprep.subr.mxu0 0.0
          %621 = vmatpush2.xpose.msra.mxu0 0.0
          %622 = vmatprep.subr.mxu0 0.0
          %623 = vmatpush2.xpose.msra.mxu0 0.0
          %624 = vmatprep.subr.mxu0 0.0
          %625 = vmatpush2.xpose.msra.mxu0 0.0
          %626 = vmatprep.subr.mxu0 0.0
          %627 = vmatpush2.xpose.msra.mxu0 0.0
          %628 = vmatprep.subr.mxu0 0.0
          %629 = vmatpush2.xpose.msra.mxu0 0.0
          %630 = vmatprep.mubr.f32.mxu0 0.0
          %631 = vmatmul.mubr.f32.gmra.mxu0 %v558
          %v632 = vpop.f32.mrf.mxu0
          %v633 = vadd.f32 0.0, %v632
          %v634 = vpop.f32.mrf.mxu0
          %635 = vdwg.mxu0
          %v637 = vsel %vm398, %v381, 0
          %v640 = vsel %vm398, %v388, 0
          %v643 = vsel %vm398, %v389, 0
          %645 = vmatprep.subr.mxu0 0.0
          %646 = vmatpush1.xpose.msra.mxu0 0.0
          %647 = vmatprep.subr.mxu0 0.0
          %648 = vmatpush1.xpose.msra.mxu0 0.0
          %649 = vmatprep.subr.mxu0 0.0
          %650 = vmatpush1.xpose.msra.mxu0 0.0
          %651 = vmatprep.subr.mxu0 0.0
          %652 = vmatpush1.xpose.msra.mxu0 0.0
          %653 = vmatprep.subr.mxu0 0.0
          %654 = vmatpush1.xpose.msra.mxu0 0.0
          %655 = vmatprep.subr.mxu0 0.0
          %656 = vmatpush1.xpose.msra.mxu0 0.0
          %657 = vmatprep.subr.mxu0 0.0
          %658 = vmatpush1.xpose.msra.mxu0 0.0
          %659 = vmatprep.subr.mxu0 0.0
          %660 = vmatpush1.xpose.msra.mxu0 0.0
          %661 = vmatprep.subr.mxu0 0.0
          %662 = vmatpush1.xpose.msra.mxu0 0.0
          %663 = vmatprep.subr.mxu0 0.0
          %664 = vmatpush1.xpose.msra.mxu0 0.0
          %665 = vmatprep.subr.mxu0 0.0
          %666 = vmatpush1.xpose.msra.mxu0 0.0
          %667 = vmatprep.subr.mxu0 0.0
          %668 = vmatpush1.xpose.msra.mxu0 0.0
          %669 = vmatprep.subr.mxu0 0.0
          %670 = vmatpush1.xpose.msra.mxu0 0.0
          %671 = vmatprep.subr.mxu0 0.0
          %672 = vmatpush1.xpose.msra.mxu0 0.0
          %673 = vmatprep.subr.mxu0 0.0
          %674 = vmatpush1.xpose.msra.mxu0 %v643
          %675 = vmatprep.subr.mxu0 0.0
          %676 = vmatpush1.xpose.msra.mxu0 %v640
          %677 = vmatprep.subr.mxu0 0.0
          %678 = vmatpush2.xpose.msra.mxu0 0.0
          %679 = vmatprep.subr.mxu0 0.0
          %680 = vmatpush2.xpose.msra.mxu0 0.0
          %681 = vmatprep.subr.mxu0 0.0
          %682 = vmatpush2.xpose.msra.mxu0 0.0
          %683 = vmatprep.subr.mxu0 0.0
          %684 = vmatpush2.xpose.msra.mxu0 0.0
          %685 = vmatprep.subr.mxu0 0.0
          %686 = vmatpush2.xpose.msra.mxu0 0.0
          %687 = vmatprep.subr.mxu0 0.0
          %688 = vmatpush2.xpose.msra.mxu0 0.0
          %689 = vmatprep.subr.mxu0 0.0
          %690 = vmatpush2.xpose.msra.mxu0 0.0
          %691 = vmatprep.subr.mxu0 0.0
          %692 = vmatpush2.xpose.msra.mxu0 0.0
          %693 = vmatprep.subr.mxu0 0.0
          %694 = vmatpush2.xpose.msra.mxu0 0.0
          %695 = vmatprep.subr.mxu0 0.0
          %696 = vmatpush2.xpose.msra.mxu0 0.0
          %697 = vmatprep.subr.mxu0 0.0
          %698 = vmatpush2.xpose.msra.mxu0 0.0
          %699 = vmatprep.subr.mxu0 0.0
          %700 = vmatpush2.xpose.msra.mxu0 0.0
          %701 = vmatprep.subr.mxu0 0.0
          %702 = vmatpush2.xpose.msra.mxu0 0.0
          %703 = vmatprep.subr.mxu0 0.0
          %704 = vmatpush2.xpose.msra.mxu0 0.0
          %705 = vmatprep.subr.mxu0 0.0
          %706 = vmatpush2.xpose.msra.mxu0 0.0
          %707 = vmatprep.subr.mxu0 0.0
          %708 = vmatpush2.xpose.msra.mxu0 0.0
          %709 = vmatprep.mubr.f32.mxu0 0.0
          %710 = vmatmul.mubr.f32.gmra.mxu0 %v637
          %v711 = vpop.f32.mrf.mxu0
          %v712 = vadd.f32 0.0, %v711
          %v713 = vpop.f32.mrf.mxu0
          %714 = vdwg.mxu0
          %s715 = smul.u32 %s25, 8
          %v716 = vlaneseq
          %v717 = vshrl.u32 %v716, 7
          %v718 = vstv %s715
          %v719 = vadd.s32 %v718, %v717
          %v720 = vlaneseq
          %v721 = vand.u32 %v720, 127
          %v722 = vstv %s366
          %v723 = vadd.s32 %v722, %v721
          %vm724 = vcmp.ge.s32.totalorder %v723, 11
          %v725 = vadd.s32 %v719, 8
          %v726 = vadd.s32 %v725, 1
          %vm727 = vcmp.ge.s32.totalorder %v723, %v726
          %vm728 = vmand %vm724, %vm727
          %vm729 = vcmp.ge.s32.totalorder %v723, 16
          %vm730 = vmor %vm728, %vm729
          %v731 = vsel %vm730, 1, 0
          %vm732 = vcmp.eq.s32.totalorder %v731, 1
          %v733 = vsel %vm732, -1e+30, %v475
          %v734 = vsel %vm732, -1e+30, %v554
          %v735 = vsel %vm732, -1e+30, %v633
          %v736 = vsel %vm732, -1e+30, %v712
          %v737 = vld [vmem:[#allocation2] sm:$0xff]
          %v738 = vld [vmem:[#allocation2 + $0x8] sm:$0xff]
          %v739 = vld [vmem:[#allocation2 + $0x10] sm:$0xff]
          %v740 = vld [vmem:[#allocation2 + $0x18] sm:$0xff]
          %vm741 = vcmask 130048
          %v742 = vsel %vm741, %v733, -inf
          %743 = vmax.xlane.f32.xlu0 %v742
          %v744 = vpop.xlane.xlu0 %743
          %v745 = vsel %vm741, %v734, -inf
          %746 = vmax.xlane.f32.xlu0 %v745
          %v747 = vpop.xlane.xlu0 %746
          %v748 = vsel %vm741, %v735, -inf
          %749 = vmax.xlane.f32.xlu0 %v748
          %v750 = vpop.xlane.xlu0 %749
          %v751 = vsel %vm741, %v736, -inf
          %752 = vmax.xlane.f32.xlu0 %v751
          %v753 = vpop.xlane.xlu0 %752
          %v754 = vmax.f32 %v737, %v744
          %v755 = vmax.f32 %v738, %v747
          %v756 = vmax.f32 %v739, %v750
          %v757 = vmax.f32 %v740, %v753
          %v758 = vsub.f32 %v737, %v754
          %v759 = vsub.f32 %v738, %v755
          %v760 = vsub.f32 %v739, %v756
          %v761 = vsub.f32 %v740, %v757
          %v762 = vmul.f32 %v758, 1.442695
          %v763 = vpow.pop %v762
          %v764 = vmul.f32 %v759, 1.442695
          %v765 = vpow.pop %v764
          %v766 = vmul.f32 %v760, 1.442695
          %v767 = vpow.pop %v766
          %v768 = vmul.f32 %v761, 1.442695
          %v769 = vpow.pop %v768
          %771 = vset.pattern.permute.xlu0 0
          %772 = vperm.xlu0 %771, %v754
          %v773 = vpop.permute.xlu0 %772
          %776 = vset.pattern.permute.xlu0 0
          %777 = vperm.xlu0 %776, %v755
          %v778 = vpop.permute.xlu0 %777
          %781 = vset.pattern.permute.xlu0 0
          %782 = vperm.xlu0 %781, %v756
          %v783 = vpop.permute.xlu0 %782
          %786 = vset.pattern.permute.xlu0 0
          %787 = vperm.xlu0 %786, %v757
          %v788 = vpop.permute.xlu0 %787
          %v790 = vsub.f32 %v733, %v773
          %v791 = vsub.f32 %v734, %v778
          %v792 = vsub.f32 %v735, %v783
          %v793 = vsub.f32 %v736, %v788
          %v794 = vmul.f32 %v790, 1.442695
          %v795 = vpow.pop %v794
          %v796 = vmul.f32 %v791, 1.442695
          %v797 = vpow.pop %v796
          %v798 = vmul.f32 %v792, 1.442695
          %v799 = vpow.pop %v798
          %v800 = vmul.f32 %v793, 1.442695
          %v801 = vpow.pop %v800
          %v802 = vld [vmem:[#allocation3] sm:$0xff]
          %v803 = vld [vmem:[#allocation3 + $0x8] sm:$0xff]
          %v804 = vld [vmem:[#allocation3 + $0x10] sm:$0xff]
          %v805 = vld [vmem:[#allocation3 + $0x18] sm:$0xff]
          %v806 = vmul.f32 %v763, %v802
          %v807 = vmul.f32 %v765, %v803
          %v808 = vmul.f32 %v767, %v804
          %v809 = vmul.f32 %v769, %v805
          %v810 = vsel %vm741, %v795, 0.0
          %811 = vadd.xlane.f32.xlu0 %v810
          %v812 = vpop.xlane.xlu0 %811
          %v813 = vsel %vm741, %v797, 0.0
          %814 = vadd.xlane.f32.xlu0 %v813
          %v815 = vpop.xlane.xlu0 %814
          %v816 = vsel %vm741, %v799, 0.0
          %817 = vadd.xlane.f32.xlu0 %v816
          %v818 = vpop.xlane.xlu0 %817
          %v819 = vsel %vm741, %v801, 0.0
          %820 = vadd.xlane.f32.xlu0 %v819
          %v821 = vpop.xlane.xlu0 %820
          %v822 = vadd.f32 %v806, %v812
          %v823 = vadd.f32 %v807, %v815
          %v824 = vadd.f32 %v808, %v818
          %v825 = vadd.f32 %v809, %v821
          %vm826 = vcmask 7168
          %827 = vst.msk [vmem:[#allocation3] sm:$0xff] %vm826, %v822
          %828 = vst.msk [vmem:[#allocation3 + $0x8] sm:$0xff] %vm826, %v823
          %829 = vst.msk [vmem:[#allocation3 + $0x10] sm:$0xff] %vm826, %v824
          %830 = vst.msk [vmem:[#allocation3 + $0x18] sm:$0xff] %vm826, %v825
          %v831 = vld [vmem:[#allocation4] sm:$0xff]
          %v832 = vld [vmem:[#allocation4 + $0x8] sm:$0xff]
          %v833 = vld [vmem:[#allocation4 + $0x10] sm:$0xff]
          %v834 = vld [vmem:[#allocation4 + $0x18] sm:$0xff]
          %836 = vset.pattern.permute.xlu0 0
          %837 = vperm.xlu0 %836, %v763
          %v838 = vpop.permute.xlu0 %837
          %841 = vset.pattern.permute.xlu0 0
          %842 = vperm.xlu0 %841, %v765
          %v843 = vpop.permute.xlu0 %842
          %846 = vset.pattern.permute.xlu0 0
          %847 = vperm.xlu0 %846, %v767
          %v848 = vpop.permute.xlu0 %847
          %851 = vset.pattern.permute.xlu0 0
          %852 = vperm.xlu0 %851, %v769
          %v853 = vpop.permute.xlu0 %852
          %v855 = vmul.f32 %v838, %v831
          %v856 = vmul.f32 %v843, %v832
          %v857 = vmul.f32 %v848, %v833
          %v858 = vmul.f32 %v853, %v834
          %v860 = vsel %vm741, %v795, 0
          %862 = vmatprep.subr.mxu0 0.0
          %863 = vmatpush1.msra.mxu0 0.0
          %864 = vmatprep.subr.mxu0 0.0
          %865 = vmatpush1.msra.mxu0 0.0
          %866 = vmatprep.subr.mxu0 0.0
          %867 = vmatpush1.msra.mxu0 0.0
          %868 = vmatprep.subr.mxu0 0.0
          %869 = vmatpush1.msra.mxu0 0.0
          %870 = vmatprep.subr.mxu0 0.0
          %871 = vmatpush1.msra.mxu0 0.0
          %872 = vmatprep.subr.mxu0 0.0
          %873 = vmatpush1.msra.mxu0 0.0
          %874 = vmatprep.subr.mxu0 0.0
          %875 = vmatpush1.msra.mxu0 0.0
          %876 = vmatprep.subr.mxu0 0.0
          %877 = vmatpush1.msra.mxu0 0.0
          %878 = vmatprep.subr.mxu0 0.0
          %879 = vmatpush1.msra.mxu0 0.0
          %880 = vmatprep.subr.mxu0 0.0
          %881 = vmatpush1.msra.mxu0 0.0
          %882 = vmatprep.subr.mxu0 0.0
          %883 = vmatpush1.msra.mxu0 0.0
          %884 = vmatprep.subr.mxu0 0.0
          %885 = vmatpush1.msra.mxu0 0.0
          %886 = vmatprep.subr.mxu0 0.0
          %887 = vmatpush1.msra.mxu0 0.0
          %888 = vmatprep.subr.mxu0 0.0
          %889 = vmatpush1.msra.mxu0 0.0
          %890 = vmatprep.subr.mxu0 0.0
          %891 = vmatpush1.msra.mxu0 %v391
          %892 = vmatprep.subr.mxu0 0.0
          %893 = vmatpush1.msra.mxu0 %v390
          %894 = vmatprep.subr.mxu0 0.0
          %895 = vmatpush2.msra.mxu0 0.0
          %896 = vmatprep.subr.mxu0 0.0
          %897 = vmatpush2.msra.mxu0 0.0
          %898 = vmatprep.subr.mxu0 0.0
          %899 = vmatpush2.msra.mxu0 0.0
          %900 = vmatprep.subr.mxu0 0.0
          %901 = vmatpush2.msra.mxu0 0.0
          %902 = vmatprep.subr.mxu0 0.0
          %903 = vmatpush2.msra.mxu0 0.0
          %904 = vmatprep.subr.mxu0 0.0
          %905 = vmatpush2.msra.mxu0 0.0
          %906 = vmatprep.subr.mxu0 0.0
          %907 = vmatpush2.msra.mxu0 0.0
          %908 = vmatprep.subr.mxu0 0.0
          %909 = vmatpush2.msra.mxu0 0.0
          %910 = vmatprep.subr.mxu0 0.0
          %911 = vmatpush2.msra.mxu0 0.0
          %912 = vmatprep.subr.mxu0 0.0
          %913 = vmatpush2.msra.mxu0 0.0
          %914 = vmatprep.subr.mxu0 0.0
          %915 = vmatpush2.msra.mxu0 0.0
          %916 = vmatprep.subr.mxu0 0.0
          %917 = vmatpush2.msra.mxu0 0.0
          %918 = vmatprep.subr.mxu0 0.0
          %919 = vmatpush2.msra.mxu0 0.0
          %920 = vmatprep.subr.mxu0 0.0
          %921 = vmatpush2.msra.mxu0 0.0
          %922 = vmatprep.subr.mxu0 0.0
          %923 = vmatpush2.msra.mxu0 0.0
          %924 = vmatprep.subr.mxu0 0.0
          %925 = vmatpush2.msra.mxu0 0.0
          %926 = vmatprep.mubr.f32.mxu0 0.0
          %927 = vmatmul.mubr.f32.gmra.mxu0 %v860
          %v928 = vpop.f32.mrf.mxu0
          %v929 = vadd.f32 0.0, %v928
          %v930 = vpop.f32.mrf.mxu0
          %931 = vdwg.mxu0
          %v933 = vsel %vm741, %v797, 0
          %935 = vmatprep.subr.mxu0 0.0
          %936 = vmatpush1.msra.mxu0 0.0
          %937 = vmatprep.subr.mxu0 0.0
          %938 = vmatpush1.msra.mxu0 0.0
          %939 = vmatprep.subr.mxu0 0.0
          %940 = vmatpush1.msra.mxu0 0.0
          %941 = vmatprep.subr.mxu0 0.0
          %942 = vmatpush1.msra.mxu0 0.0
          %943 = vmatprep.subr.mxu0 0.0
          %944 = vmatpush1.msra.mxu0 0.0
          %945 = vmatprep.subr.mxu0 0.0
          %946 = vmatpush1.msra.mxu0 0.0
          %947 = vmatprep.subr.mxu0 0.0
          %948 = vmatpush1.msra.mxu0 0.0
          %949 = vmatprep.subr.mxu0 0.0
          %950 = vmatpush1.msra.mxu0 0.0
          %951 = vmatprep.subr.mxu0 0.0
          %952 = vmatpush1.msra.mxu0 0.0
          %953 = vmatprep.subr.mxu0 0.0
          %954 = vmatpush1.msra.mxu0 0.0
          %955 = vmatprep.subr.mxu0 0.0
          %956 = vmatpush1.msra.mxu0 0.0
          %957 = vmatprep.subr.mxu0 0.0
          %958 = vmatpush1.msra.mxu0 0.0
          %959 = vmatprep.subr.mxu0 0.0
          %960 = vmatpush1.msra.mxu0 0.0
          %961 = vmatprep.subr.mxu0 0.0
          %962 = vmatpush1.msra.mxu0 0.0
          %963 = vmatprep.subr.mxu0 0.0
          %964 = vmatpush1.msra.mxu0 %v393
          %965 = vmatprep.subr.mxu0 0.0
          %966 = vmatpush1.msra.mxu0 %v392
          %967 = vmatprep.subr.mxu0 0.0
          %968 = vmatpush2.msra.mxu0 0.0
          %969 = vmatprep.subr.mxu0 0.0
          %970 = vmatpush2.msra.mxu0 0.0
          %971 = vmatprep.subr.mxu0 0.0
          %972 = vmatpush2.msra.mxu0 0.0
          %973 = vmatprep.subr.mxu0 0.0
          %974 = vmatpush2.msra.mxu0 0.0
          %975 = vmatprep.subr.mxu0 0.0
          %976 = vmatpush2.msra.mxu0 0.0
          %977 = vmatprep.subr.mxu0 0.0
          %978 = vmatpush2.msra.mxu0 0.0
          %979 = vmatprep.subr.mxu0 0.0
          %980 = vmatpush2.msra.mxu0 0.0
          %981 = vmatprep.subr.mxu0 0.0
          %982 = vmatpush2.msra.mxu0 0.0
          %983 = vmatprep.subr.mxu0 0.0
          %984 = vmatpush2.msra.mxu0 0.0
          %985 = vmatprep.subr.mxu0 0.0
          %986 = vmatpush2.msra.mxu0 0.0
          %987 = vmatprep.subr.mxu0 0.0
          %988 = vmatpush2.msra.mxu0 0.0
          %989 = vmatprep.subr.mxu0 0.0
          %990 = vmatpush2.msra.mxu0 0.0
          %991 = vmatprep.subr.mxu0 0.0
          %992 = vmatpush2.msra.mxu0 0.0
          %993 = vmatprep.subr.mxu0 0.0
          %994 = vmatpush2.msra.mxu0 0.0
          %995 = vmatprep.subr.mxu0 0.0
          %996 = vmatpush2.msra.mxu0 0.0
          %997 = vmatprep.subr.mxu0 0.0
          %998 = vmatpush2.msra.mxu0 0.0
          %999 = vmatprep.mubr.f32.mxu0 0.0
          %1000 = vmatmul.mubr.f32.gmra.mxu0 %v933
          %v1001 = vpop.f32.mrf.mxu0
          %v1002 = vadd.f32 0.0, %v1001
          %v1003 = vpop.f32.mrf.mxu0
          %1004 = vdwg.mxu0
          %v1006 = vsel %vm741, %v799, 0
          %1008 = vmatprep.subr.mxu0 0.0
          %1009 = vmatpush1.msra.mxu0 0.0
          %1010 = vmatprep.subr.mxu0 0.0
          %1011 = vmatpush1.msra.mxu0 0.0
          %1012 = vmatprep.subr.mxu0 0.0
          %1013 = vmatpush1.msra.mxu0 0.0
          %1014 = vmatprep.subr.mxu0 0.0
          %1015 = vmatpush1.msra.mxu0 0.0
          %1016 = vmatprep.subr.mxu0 0.0
          %1017 = vmatpush1.msra.mxu0 0.0
          %1018 = vmatprep.subr.mxu0 0.0
          %1019 = vmatpush1.msra.mxu0 0.0
          %1020 = vmatprep.subr.mxu0 0.0
          %1021 = vmatpush1.msra.mxu0 0.0
          %1022 = vmatprep.subr.mxu0 0.0
          %1023 = vmatpush1.msra.mxu0 0.0
          %1024 = vmatprep.subr.mxu0 0.0
          %1025 = vmatpush1.msra.mxu0 0.0
          %1026 = vmatprep.subr.mxu0 0.0
          %1027 = vmatpush1.msra.mxu0 0.0
          %1028 = vmatprep.subr.mxu0 0.0
          %1029 = vmatpush1.msra.mxu0 0.0
          %1030 = vmatprep.subr.mxu0 0.0
          %1031 = vmatpush1.msra.mxu0 0.0
          %1032 = vmatprep.subr.mxu0 0.0
          %1033 = vmatpush1.msra.mxu0 0.0
          %1034 = vmatprep.subr.mxu0 0.0
          %1035 = vmatpush1.msra.mxu0 0.0
          %1036 = vmatprep.subr.mxu0 0.0
          %1037 = vmatpush1.msra.mxu0 %v395
          %1038 = vmatprep.subr.mxu0 0.0
          %1039 = vmatpush1.msra.mxu0 %v394
          %1040 = vmatprep.subr.mxu0 0.0
          %1041 = vmatpush2.msra.mxu0 0.0
          %1042 = vmatprep.subr.mxu0 0.0
          %1043 = vmatpush2.msra.mxu0 0.0
          %1044 = vmatprep.subr.mxu0 0.0
          %1045 = vmatpush2.msra.mxu0 0.0
          %1046 = vmatprep.subr.mxu0 0.0
          %1047 = vmatpush2.msra.mxu0 0.0
          %1048 = vmatprep.subr.mxu0 0.0
          %1049 = vmatpush2.msra.mxu0 0.0
          %1050 = vmatprep.subr.mxu0 0.0
          %1051 = vmatpush2.msra.mxu0 0.0
          %1052 = vmatprep.subr.mxu0 0.0
          %1053 = vmatpush2.msra.mxu0 0.0
          %1054 = vmatprep.subr.mxu0 0.0
          %1055 = vmatpush2.msra.mxu0 0.0
          %1056 = vmatprep.subr.mxu0 0.0
          %1057 = vmatpush2.msra.mxu0 0.0
          %1058 = vmatprep.subr.mxu0 0.0
          %1059 = vmatpush2.msra.mxu0 0.0
          %1060 = vmatprep.subr.mxu0 0.0
          %1061 = vmatpush2.msra.mxu0 0.0
          %1062 = vmatprep.subr.mxu0 0.0
          %1063 = vmatpush2.msra.mxu0 0.0
          %1064 = vmatprep.subr.mxu0 0.0
          %1065 = vmatpush2.msra.mxu0 0.0
          %1066 = vmatprep.subr.mxu0 0.0
          %1067 = vmatpush2.msra.mxu0 0.0
          %1068 = vmatprep.subr.mxu0 0.0
          %1069 = vmatpush2.msra.mxu0 0.0
          %1070 = vmatprep.subr.mxu0 0.0
          %1071 = vmatpush2.msra.mxu0 0.0
          %1072 = vmatprep.mubr.f32.mxu0 0.0
          %1073 = vmatmul.mubr.f32.gmra.mxu0 %v1006
          %v1074 = vpop.f32.mrf.mxu0
          %v1075 = vadd.f32 0.0, %v1074
          %v1076 = vpop.f32.mrf.mxu0
          %1077 = vdwg.mxu0
          %v1079 = vsel %vm741, %v801, 0
          %1081 = vmatprep.subr.mxu0 0.0
          %1082 = vmatpush1.msra.mxu0 0.0
          %1083 = vmatprep.subr.mxu0 0.0
          %1084 = vmatpush1.msra.mxu0 0.0
          %1085 = vmatprep.subr.mxu0 0.0
          %1086 = vmatpush1.msra.mxu0 0.0
          %1087 = vmatprep.subr.mxu0 0.0
          %1088 = vmatpush1.msra.mxu0 0.0
          %1089 = vmatprep.subr.mxu0 0.0
          %1090 = vmatpush1.msra.mxu0 0.0
          %1091 = vmatprep.subr.mxu0 0.0
          %1092 = vmatpush1.msra.mxu0 0.0
          %1093 = vmatprep.subr.mxu0 0.0
          %1094 = vmatpush1.msra.mxu0 0.0
          %1095 = vmatprep.subr.mxu0 0.0
          %1096 = vmatpush1.msra.mxu0 0.0
          %1097 = vmatprep.subr.mxu0 0.0
          %1098 = vmatpush1.msra.mxu0 0.0
          %1099 = vmatprep.subr.mxu0 0.0
          %1100 = vmatpush1.msra.mxu0 0.0
          %1101 = vmatprep.subr.mxu0 0.0
          %1102 = vmatpush1.msra.mxu0 0.0
          %1103 = vmatprep.subr.mxu0 0.0
          %1104 = vmatpush1.msra.mxu0 0.0
          %1105 = vmatprep.subr.mxu0 0.0
          %1106 = vmatpush1.msra.mxu0 0.0
          %1107 = vmatprep.subr.mxu0 0.0
          %1108 = vmatpush1.msra.mxu0 0.0
          %1109 = vmatprep.subr.mxu0 0.0
          %1110 = vmatpush1.msra.mxu0 %v397
          %1111 = vmatprep.subr.mxu0 0.0
          %1112 = vmatpush1.msra.mxu0 %v396
          %1113 = vmatprep.subr.mxu0 0.0
          %1114 = vmatpush2.msra.mxu0 0.0
          %1115 = vmatprep.subr.mxu0 0.0
          %1116 = vmatpush2.msra.mxu0 0.0
          %1117 = vmatprep.subr.mxu0 0.0
          %1118 = vmatpush2.msra.mxu0 0.0
          %1119 = vmatprep.subr.mxu0 0.0
          %1120 = vmatpush2.msra.mxu0 0.0
          %1121 = vmatprep.subr.mxu0 0.0
          %1122 = vmatpush2.msra.mxu0 0.0
          %1123 = vmatprep.subr.mxu0 0.0
          %1124 = vmatpush2.msra.mxu0 0.0
          %1125 = vmatprep.subr.mxu0 0.0
          %1126 = vmatpush2.msra.mxu0 0.0
          %1127 = vmatprep.subr.mxu0 0.0
          %1128 = vmatpush2.msra.mxu0 0.0
          %1129 = vmatprep.subr.mxu0 0.0
          %1130 = vmatpush2.msra.mxu0 0.0
          %1131 = vmatprep.subr.mxu0 0.0
          %1132 = vmatpush2.msra.mxu0 0.0
          %1133 = vmatprep.subr.mxu0 0.0
          %1134 = vmatpush2.msra.mxu0 0.0
          %1135 = vmatprep.subr.mxu0 0.0
          %1136 = vmatpush2.msra.mxu0 0.0
          %1137 = vmatprep.subr.mxu0 0.0
          %1138 = vmatpush2.msra.mxu0 0.0
          %1139 = vmatprep.subr.mxu0 0.0
          %1140 = vmatpush2.msra.mxu0 0.0
          %1141 = vmatprep.subr.mxu0 0.0
          %1142 = vmatpush2.msra.mxu0 0.0
          %1143 = vmatprep.subr.mxu0 0.0
          %1144 = vmatpush2.msra.mxu0 0.0
          %1145 = vmatprep.mubr.f32.mxu0 0.0
          %1146 = vmatmul.mubr.f32.gmra.mxu0 %v1079
          %v1147 = vpop.f32.mrf.mxu0
          %v1148 = vadd.f32 0.0, %v1147
          %v1149 = vpop.f32.mrf.mxu0
          %1150 = vdwg.mxu0
          %v1151 = vadd.f32 %v855, %v929
          %v1152 = vadd.f32 %v856, %v1002
          %v1153 = vadd.f32 %v857, %v1075
          %v1154 = vadd.f32 %v858, %v1148
          %1155 = vst.msk [vmem:[#allocation4] sm:$0xff] %vm398, %v1151
          %1156 = vst.msk [vmem:[#allocation4 + $0x8] sm:$0xff] %vm398, %v1152
          %1157 = vst.msk [vmem:[#allocation4 + $0x10] sm:$0xff] %vm398, %v1153
          %1158 = vst.msk [vmem:[#allocation4 + $0x18] sm:$0xff] %vm398, %v1154
          %1159 = vst.msk [vmem:[#allocation2] sm:$0xff] %vm826, %v754
          %1160 = vst.msk [vmem:[#allocation2 + $0x8] sm:$0xff] %vm826, %v755
          %1161 = vst.msk [vmem:[#allocation2 + $0x10] sm:$0xff] %vm826, %v756
          %1162 = vst.msk [vmem:[#allocation2 + $0x18] sm:$0xff] %vm826, %v757
        $region40: #{tpu_custom_call.1} parent=31 // pred_fallthru
          _
        // Predicated region
        $region41: #{tpu_custom_call.1} parent=31 // pred_check
          %p1163 = pneg %p336
        $region42: #{tpu_custom_call.1} parent=31 // pred_check_branch
          %1165 = sbr.rel (%p1163) target = $region44
        $region43: #{tpu_custom_call.1} parent=31 // pred_region
          %v1166 = vld [vmem:[#allocation3] sm:$0xff]
          %v1167 = vld [vmem:[#allocation3 + $0x8] sm:$0xff]
          %v1168 = vld [vmem:[#allocation3 + $0x10] sm:$0xff]
          %v1169 = vld [vmem:[#allocation3 + $0x18] sm:$0xff]
          %v1170 = vrcp.pop %v1166
          %v1171 = vrcp.pop %v1167
          %v1172 = vrcp.pop %v1168
          %v1173 = vrcp.pop %v1169
          %v1174 = vld [vmem:[#allocation4] sm:$0xff]
          %v1175 = vld [vmem:[#allocation4 + $0x8] sm:$0xff]
          %v1176 = vld [vmem:[#allocation4 + $0x10] sm:$0xff]
          %v1177 = vld [vmem:[#allocation4 + $0x18] sm:$0xff]
          %1179 = vset.pattern.permute.xlu0 0
          %1180 = vperm.xlu0 %1179, %v1170
          %v1181 = vpop.permute.xlu0 %1180
          %1184 = vset.pattern.permute.xlu0 0
          %1185 = vperm.xlu0 %1184, %v1171
          %v1186 = vpop.permute.xlu0 %1185
          %1189 = vset.pattern.permute.xlu0 0
          %1190 = vperm.xlu0 %1189, %v1172
          %v1191 = vpop.permute.xlu0 %1190
          %1194 = vset.pattern.permute.xlu0 0
          %1195 = vperm.xlu0 %1194, %v1173
          %v1196 = vpop.permute.xlu0 %1195
          %v1198 = vmul.f32 %v1174, %v1181
          %v1199 = vmul.f32 %v1175, %v1186
          %v1200 = vmul.f32 %v1176, %v1191
          %v1201 = vmul.f32 %v1177, %v1196
          %1203 = vrot.lane.b32.xlu0 %v1199, 8
          %v1204 = vpop.permute.xlu0 %1203
          %1207 = vrot.lane.b32.xlu0 %v1200, 16
          %v1208 = vpop.permute.xlu0 %1207
          %1211 = vrot.lane.b32.xlu0 %v1201, 24
          %v1212 = vpop.permute.xlu0 %1211
          %vm1214 = vcmask 64512
          %v1215 = vsel %vm1214, %v1198, %v1204
          %vm1216 = vcmask 130048
          %v1217 = vsel %vm1216, %v1215, %v1208
          %vm1218 = vcmask 195584
          %v1219 = vsel %vm1218, %v1217, %v1212
          %vm1220 = vcmask 261120
          %1221 = vst.msk [vmem:[%s290] sm:$0xff] %vm1220, %v1219
        $region44: #{tpu_custom_call.1} parent=31 // pred_fallthru
          _
        %s1222 = sand.u32 %s145, 1
        %s1223 = scalar_lea.sflag [#allocation7], %s1222
        %s1224 = sand.u32 %s145, 1
        %s1225 = smul.addr %s1224, 8
        %s1226 = scalar_lea.vmem [#allocation6], %s1225
        // Predicated region
        $region45: #{tpu_custom_call.1} parent=31 // pred_check
          %p1227 = pneg %p155
        $region46: #{tpu_custom_call.1} parent=31 // pred_check_branch
          %1229 = sbr.rel (%p1227) target = $region48
        $region47: #{tpu_custom_call.1} parent=31 // pred_region
          %s1231 = ssub.s32 128, 128
          %1232 = vsyncadd %s1223, %s1231
          %s1233 = sadd.s32 %s24, %s25
          %s1234 = sadd.s32 %s1233, %s23
          %s1235 = smul.addr %s1234, 128
          %s1236 = scalar_lea.hbm %s3, %s1235
          %s1238 = sshll.u32 %s1226, 4
          %s1239 = int_to_ptr.vmem [resolvable:$true] %s1238
          %1241 = dma.vmem_to_hbm [thread:$0]  %s1239, 128, %s1236, %s1223
        $region48: #{tpu_custom_call.1} parent=31 // pred_fallthru
          _
      $region32: #{tpu_custom_call.1} parent=5 // pred_fallthru
        _
      %p1242 = scmp.le.s32.totalorder 2, %s12
      // Predicated region
      $region49: #{tpu_custom_call.1} parent=5 // pred_check
        %p1243 = pneg %p1242
      $region50: #{tpu_custom_call.1} parent=5 // pred_check_branch
        %1245 = sbr.rel (%p1243) target = $region52
      $region51: #{tpu_custom_call.1} parent=5 // pred_region
        %s1246 = ssub.s32 %s12, 2
        // Predicated region
        $region53: #{tpu_custom_call.1} parent=51 // pred_check
          %p1247 = pneg %p161
        $region54: #{tpu_custom_call.1} parent=51 // pred_check_branch
          %1249 = sbr.rel (%p1247) target = $region56
        $region55: #{tpu_custom_call.1} parent=51 // pred_region
          %s1250 = sand.u32 %s146, 1
          %s1251 = scalar_lea.sflag [#allocation7], %s1250
          %s1252 = sand.u32 %s146, 1
          %s1253 = smul.addr %s1252, 8
          %s1254 = scalar_lea.vmem [#allocation6], %s1253
          %1255 = dma.done %s1251, 128
        $region56: #{tpu_custom_call.1} parent=51 // pred_fallthru
          _
      $region52: #{tpu_custom_call.1} parent=5 // pred_fallthru
        _
    $region6: #{tpu_custom_call.1} parent=1 // loop_footer
      %s16 = sadd.s32 1, %s12
    $region7: #{tpu_custom_call.1} parent=1 // loop_footer_branch
      %11 = sbr.rel target = $region3
    $region8: #{tpu_custom_call.1} parent=1 // loop_exit
      _
    %1256 = vsyncpa [#allocation7], 1
    %s1257 = scalar_lea.sflag [#allocation7], 1
    %1258 = vsyncpa %s1257, 1

</llo_original>
